<compile_context>
chip_gen: v7x
topology: tpu7x:2x2x1
jax: 0.10.0
libtpu: 0.0.40
codegen_flags: <defaults>
</compile_context>

<pallas_src>
import functools

import jax
import jax.numpy as jnp
import numpy as np
from jax import lax
from jax.experimental import pallas as pl
from jax.experimental.pallas import tpu as pltpu

_KH, _KW, _PH, _PW = 3, 5, 1, 2          # kernel_size=[3,5], padding=[1,2] (fixed by module)


# ------------------------------ in-kernel helpers ----------------------------- #

def _slide_w(row, w_out, op, pad_val):
    """Stride-1 width-5 sliding reduce along the lane axis of a (Bb, C, W) row.

    The 2-column pads live in registers (small lane-axis concat); no scratch stores."""
    bb, cc, _ = row.shape
    pad = jnp.full((bb, cc, _PW), pad_val, dtype=row.dtype)
    rp = jnp.concatenate([pad, row, pad], axis=-1)        # (Bb, C, W + 2*_PW)
    acc = rp[..., 0:w_out]
    for dw in range(1, _KW):
        acc = op(acc, rp[..., dw:dw + w_out])
    return acc


def _pool_h(rows, h_src, h_out, sh, op):
    """Strided height-3 reduce over a list of (Bb, C, W) rows with static clamping.

    Out-of-range rows are skipped, which is exact for both pools: avg zero-pads and
    divides by 15 regardless (count_include_pad=True) and max pads with -inf."""
    out = []
    for i in range(h_out):
        acc = None
        for dh in range(_KH):
            r = i * sh - _PH + dh
            if 0 <= r < h_src:
                acc = rows[r] if acc is None else op(acc, rows[r])
        out.append(acc)
    return out


# --------------------------------- fused kernel -------------------------------- #

def _subsample_kernel(x_ref, w_ref, p_ref, o_ref, *, img_h, sh, eps):
    Bb, C, HW = x_ref.shape
    W = HW // img_h
    H1 = (img_h + 2 * _PH - _KH) // sh + 1
    W1 = (W + 2 * _PW - _KW) // 1 + 1            # stride[1] == 1  ->  W1 == W
    H2 = (H1 + 2 * _PH - _KH) // sh + 1
    N, C_out = o_ref.shape[1], o_ref.shape[2]

    x = x_ref[...].astype(jnp.float32)           # native layout/dtype in HBM; cast here

    # ---- stage 1: AvgPool2d(3x5, stride, pad (1,2)), separable, stride in-kernel ----
    # TODO(synk): for realistic H (>~32 rows) replace the unrolled per-row lists with a
    # stacked-array / fori_loop formulation to bound vreg/VMEM temporary pressure.
    rw = [_slide_w(x[..., r * W:(r + 1) * W], W1, lambda a, b: a + b, 0.0)
          for r in range(img_h)]                 # each (Bb, C, W1)
    inv = 1.0 / float(_KH * _KW)                 # count_include_pad=True -> always /15
    x1_rows = [r * inv for r in _pool_h(rw, img_h, H1, sh, lambda a, b: a + b)]

    # ---- stage 2: MaxPool2d(3x5, stride, pad (1,2)) applied to x1 (as in the module) ----
    rwm = [_slide_w(r, W1, jnp.maximum, -jnp.inf) for r in x1_rows]
    x2_rows = _pool_h(rwm, H1, H2, sh, jnp.maximum)

    # ---- combine: x = (x1 + x2) * 0.5 with PyTorch broadcasting over the pooled-H axis ----
    if H2 == H1:
        comb = [(x1_rows[i] + x2_rows[i]) * 0.5 for i in range(H1)]
    elif H2 == 1:
        comb = [(x1_rows[i] + x2_rows[0]) * 0.5 for i in range(H1)]
    else:                                        # H1 == 1 (validated in the wrapper)
        comb = [(x1_rows[0] + x2_rows[j]) * 0.5 for j in range(H2)]

    # Sequence in transposed (C_in, Bb*N) form, n = h_out*W1 + w.  Channels never leave
    # the sublane axis, so the projection consumes them directly as the MXU rhs.
    comb_flat = comb[0] if len(comb) == 1 else jnp.concatenate(comb, axis=-1)  # (Bb, C, N)
    per_img = [comb_flat[b] for b in range(Bb)]                                # each (C, N)
    seq_t = per_img[0] if Bb == 1 else jnp.concatenate(per_img, axis=-1)       # (C, Bb*N)

    # ---- projection (one MXU matmul per grid step) + LayerNorm, in (C_out, M) form ----
    w = w_ref[...].astype(jnp.float32)                                         # (C_out, C_in)
    y = jnp.dot(w, seq_t, preferred_element_type=jnp.float32)                  # (C_out, Bb*N)
    y = y + p_ref[:, 0:1]                                                      # + bias
    mu = jnp.mean(y, axis=0, keepdims=True)
    var = jnp.mean(jnp.square(y - mu), axis=0, keepdims=True)
    out_t = (y - mu) * lax.rsqrt(var + eps) * p_ref[:, 1:2] + p_ref[:, 2:3]
    # TODO(synk): get_act_layer(norm) is undefined in the reference snippet; identity used.

    # ---- lane-dense per-image (N, C_out) writeback ----
    for b in range(Bb):
        o_ref[b] = out_t[:, b * N:(b + 1) * N].T.astype(o_ref.dtype)


# ----------------------------------- wrapper ----------------------------------- #

def subsample_forward(x, params, stride=(2, 1)):
    """Pallas TPU implementation of SubSample.forward (apply_pool=True).  x is NCHW."""
    B, C, H, W = x.shape
    sh, sw = stride
    if sw != 1:
        # TODO(synk): the fused kernel supports the module's default W-stride of 1 only.
        raise NotImplementedError("fused SubSample kernel requires stride[1] == 1")

    H1 = (H + 2 * _PH - _KH) // sh + 1
    W1 = (W + 2 * _PW - _KW) // sw + 1
    H2 = (H1 + 2 * _PH - _KH) // sh + 1
    if not (H2 == H1 or H2 == 1 or H1 == 1):
        raise ValueError("(x1 + x2) does not broadcast -- mirrors the PyTorch module")
    N = max(H1, H2) * W1

    w = params["proj_w"]                                   # (C_out, C_in), used as-is
    C_out = w.shape[0]
    # bias / ln_gamma / ln_beta consolidated into one (C_out, 3) array: a single tiny DMA.
    p = jnp.stack([params["proj_b"], params["ln_g"], params["ln_b"]],
                  axis=1).astype(jnp.float32)

    # FREE metadata-only reshape (no HBM pass): kernel works on (C, H*W) slabs,
    # channels on sublanes, row-major (h, w) on lanes.
    x2d = x.reshape(B, C, H * W)

    # Whole-batch (up to 8 images) per grid step: one MXU matmul per step.
    B_blk = max(d for d in range(1, min(B, 8) + 1) if B % d == 0)
    # TODO(synk): for B < 2 on v7x (2 TensorCores/chip) add a second parallel grid axis
    # (W tiles with a 2*_PW halo) so both cores get work; the same W-tiling is required
    # before scaling to real OCR feature maps so blocks stay inside v7x's 64 MiB VMEM.

    kernel = functools.partial(_subsample_kernel, img_h=H, sh=sh, eps=1e-5)
    return pl.pallas_call(
        kernel,
        out_shape=jax.ShapeDtypeStruct((B, N, C_out), jnp.float32),
        grid=(B // B_blk,),
        in_specs=[
            pl.BlockSpec((B_blk, C, H * W), lambda i: (i, 0, 0)),   # native layout/dtype
            pl.BlockSpec((C_out, C), lambda i: (0, 0)),             # PyTorch (out, in) weight
            pl.BlockSpec((C_out, 3), lambda i: (0, 0)),             # [bias | gamma | beta]
        ],
        out_specs=pl.BlockSpec((B_blk, N, C_out), lambda i: (i, 0, 0)),
        compiler_params=pltpu.CompilerParams(
            dimension_semantics=("parallel",),
            vmem_limit_bytes=32 * 1024 * 1024,
        ),
    )(x2d, w, p)


# -------------------------- pure-JAX reference (check) -------------------------- #

def subsample_ref(x, params, stride=(2, 1)):
    sh, sw = stride
    pad = [(0, 0), (0, 0), (_PH, _PH), (_PW, _PW)]
    x1 = lax.reduce_window(x, 0.0, lax.add, (1, 1, _KH, _KW), (1, 1, sh, sw), pad) / 15.0
    x2 = lax.reduce_window(x1, -jnp.inf, lax.max, (1, 1, _KH, _KW), (1, 1, sh, sw), pad)
    xc = (x1 + x2) * 0.5
    B, C, Ho, Wo = xc.shape
    seq = jnp.transpose(xc, (0, 2, 3, 1)).reshape(B, Ho * Wo, C)
    y = jnp.einsum("bnc,oc->bno", seq, params["proj_w"],
                   precision=lax.Precision.HIGHEST) + params["proj_b"]
    mu = y.mean(-1, keepdims=True)
    var = ((y - mu) ** 2).mean(-1, keepdims=True)
    return (y - mu) / jnp.sqrt(var + 1e-5) * params["ln_g"] + params["ln_b"]


if __name__ == "__main__":
    key = jax.random.PRNGKey(0)
    k_x, k_w, k_b = jax.random.split(key, 3)

    # Small but non-degenerate shapes: C_in fills half a vreg of lanes during pooling,
    # C_out=128 makes the (N, C_out) writeback exactly lane-dense, H=4 keeps the
    # module's (x1 + x2) broadcast valid for stride [2, 1].
    B, in_chs, out_chs, H, W = 2, 64, 4, 64, 64
    B, in_chs, out_chs, H, W = 2, 64, 128, 4, 64
    stride = (2, 1)

    x = jax.random.normal(k_x, (B, in_chs, H, W), dtype=jnp.float32)

    # deterministic init; shapes match nn.Linear(in_chs, out_chs) + LayerNorm(out_chs)
    bound = 1.0 / np.sqrt(in_chs)
    params = dict(
        proj_w=jax.random.uniform(k_w, (out_chs, in_chs), jnp.float32, -bound, bound),
        proj_b=jax.random.uniform(k_b, (out_chs,), jnp.float32, -bound, bound),
        ln_g=jnp.ones((out_chs,), jnp.float32),
        ln_b=jnp.zeros((out_chs,), jnp.float32),
    )

    out = subsample_forward(x, params, stride)
    out = jax.block_until_ready(out)

    ref = subsample_ref(x, params, stride)
    assert out.shape == ref.shape, (out.shape, ref.shape)
    np.testing.assert_allclose(np.asarray(out), np.asarray(ref), rtol=2e-2, atol=2e-2)

    print("KERNEL_OK")
</pallas_src>

<mosaic_0001>
module attributes {stable_mosaic.version = 11 : i64} {
  func.func @_subsample_kernel(%arg0: i32, %arg1: memref<2x64x256xf32, #tpu.memory_space<vmem>>, %arg2: memref<128x64xf32, #tpu.memory_space<vmem>>, %arg3: memref<128x3xf32, #tpu.memory_space<vmem>>, %arg4: memref<2x128x128xf32, #tpu.memory_space<vmem>>) attributes {dimension_semantics = [#tpu.dimension_semantics<parallel>], iteration_bounds = array<i64: 1>, scalar_prefetch = 0 : i64, scratch_operands = 0 : i64, tpu.core_type = #tpu.core_type<tc>, window_params = [{transform_indices = @transform_0, window_bounds = array<i64: 2, 64, 256>}, {pipeline_mode = #tpu.pipeline_mode<synchronous>, transform_indices = @transform_1, window_bounds = array<i64: 128, 64>}, {pipeline_mode = #tpu.pipeline_mode<synchronous>, transform_indices = @transform_2, window_bounds = array<i64: 128, 3>}, {transform_indices = @transform_3, window_bounds = array<i64: 2, 128, 128>}]} {
    %c0 = arith.constant 0 : index
    %c0_0 = arith.constant 0 : index
    %c0_1 = arith.constant 0 : index
    %0 = vector.load %arg1[%c0, %c0_0, %c0_1] : memref<2x64x256xf32, #tpu.memory_space<vmem>>, vector<2x64x256xf32>
    %1 = vector.extract_strided_slice %0 {offsets = [0, 0, 0], sizes = [2, 64, 64], strides = [1, 1, 1]} : vector<2x64x256xf32> to vector<2x64x64xf32>
    %cst = arith.constant 0.000000e+00 : f32
    %2 = vector.broadcast %cst : f32 to vector<2x64x2xf32>
    %3 = tpu.concatenate %2, %1, %2 in 2 : vector<2x64x2xf32>, vector<2x64x64xf32>, vector<2x64x2xf32> -> vector<2x64x68xf32>
    %4 = vector.extract_strided_slice %3 {offsets = [0, 0, 0], sizes = [2, 64, 64], strides = [1, 1, 1]} : vector<2x64x68xf32> to vector<2x64x64xf32>
    %5 = vector.extract_strided_slice %3 {offsets = [0, 0, 1], sizes = [2, 64, 64], strides = [1, 1, 1]} : vector<2x64x68xf32> to vector<2x64x64xf32>
    %6 = arith.addf %4, %5 : vector<2x64x64xf32>
    %7 = vector.extract_strided_slice %3 {offsets = [0, 0, 2], sizes = [2, 64, 64], strides = [1, 1, 1]} : vector<2x64x68xf32> to vector<2x64x64xf32>
    %8 = arith.addf %6, %7 : vector<2x64x64xf32>
    %9 = vector.extract_strided_slice %3 {offsets = [0, 0, 3], sizes = [2, 64, 64], strides = [1, 1, 1]} : vector<2x64x68xf32> to vector<2x64x64xf32>
    %10 = arith.addf %8, %9 : vector<2x64x64xf32>
    %11 = vector.extract_strided_slice %3 {offsets = [0, 0, 4], sizes = [2, 64, 64], strides = [1, 1, 1]} : vector<2x64x68xf32> to vector<2x64x64xf32>
    %12 = arith.addf %10, %11 : vector<2x64x64xf32>
    %13 = vector.extract_strided_slice %0 {offsets = [0, 0, 64], sizes = [2, 64, 64], strides = [1, 1, 1]} : vector<2x64x256xf32> to vector<2x64x64xf32>
    %cst_2 = arith.constant 0.000000e+00 : f32
    %14 = vector.broadcast %cst_2 : f32 to vector<2x64x2xf32>
    %15 = tpu.concatenate %14, %13, %14 in 2 : vector<2x64x2xf32>, vector<2x64x64xf32>, vector<2x64x2xf32> -> vector<2x64x68xf32>
    %16 = vector.extract_strided_slice %15 {offsets = [0, 0, 0], sizes = [2, 64, 64], strides = [1, 1, 1]} : vector<2x64x68xf32> to vector<2x64x64xf32>
    %17 = vector.extract_strided_slice %15 {offsets = [0, 0, 1], sizes = [2, 64, 64], strides = [1, 1, 1]} : vector<2x64x68xf32> to vector<2x64x64xf32>
    %18 = arith.addf %16, %17 : vector<2x64x64xf32>
    %19 = vector.extract_strided_slice %15 {offsets = [0, 0, 2], sizes = [2, 64, 64], strides = [1, 1, 1]} : vector<2x64x68xf32> to vector<2x64x64xf32>
    %20 = arith.addf %18, %19 : vector<2x64x64xf32>
    %21 = vector.extract_strided_slice %15 {offsets = [0, 0, 3], sizes = [2, 64, 64], strides = [1, 1, 1]} : vector<2x64x68xf32> to vector<2x64x64xf32>
    %22 = arith.addf %20, %21 : vector<2x64x64xf32>
    %23 = vector.extract_strided_slice %15 {offsets = [0, 0, 4], sizes = [2, 64, 64], strides = [1, 1, 1]} : vector<2x64x68xf32> to vector<2x64x64xf32>
    %24 = arith.addf %22, %23 : vector<2x64x64xf32>
    %25 = vector.extract_strided_slice %0 {offsets = [0, 0, 128], sizes = [2, 64, 64], strides = [1, 1, 1]} : vector<2x64x256xf32> to vector<2x64x64xf32>
    %cst_3 = arith.constant 0.000000e+00 : f32
    %26 = vector.broadcast %cst_3 : f32 to vector<2x64x2xf32>
    %27 = tpu.concatenate %26, %25, %26 in 2 : vector<2x64x2xf32>, vector<2x64x64xf32>, vector<2x64x2xf32> -> vector<2x64x68xf32>
    %28 = vector.extract_strided_slice %27 {offsets = [0, 0, 0], sizes = [2, 64, 64], strides = [1, 1, 1]} : vector<2x64x68xf32> to vector<2x64x64xf32>
    %29 = vector.extract_strided_slice %27 {offsets = [0, 0, 1], sizes = [2, 64, 64], strides = [1, 1, 1]} : vector<2x64x68xf32> to vector<2x64x64xf32>
    %30 = arith.addf %28, %29 : vector<2x64x64xf32>
    %31 = vector.extract_strided_slice %27 {offsets = [0, 0, 2], sizes = [2, 64, 64], strides = [1, 1, 1]} : vector<2x64x68xf32> to vector<2x64x64xf32>
    %32 = arith.addf %30, %31 : vector<2x64x64xf32>
    %33 = vector.extract_strided_slice %27 {offsets = [0, 0, 3], sizes = [2, 64, 64], strides = [1, 1, 1]} : vector<2x64x68xf32> to vector<2x64x64xf32>
    %34 = arith.addf %32, %33 : vector<2x64x64xf32>
    %35 = vector.extract_strided_slice %27 {offsets = [0, 0, 4], sizes = [2, 64, 64], strides = [1, 1, 1]} : vector<2x64x68xf32> to vector<2x64x64xf32>
    %36 = arith.addf %34, %35 : vector<2x64x64xf32>
    %37 = vector.extract_strided_slice %0 {offsets = [0, 0, 192], sizes = [2, 64, 64], strides = [1, 1, 1]} : vector<2x64x256xf32> to vector<2x64x64xf32>
    %cst_4 = arith.constant 0.000000e+00 : f32
    %38 = vector.broadcast %cst_4 : f32 to vector<2x64x2xf32>
    %39 = tpu.concatenate %38, %37, %38 in 2 : vector<2x64x2xf32>, vector<2x64x64xf32>, vector<2x64x2xf32> -> vector<2x64x68xf32>
    %40 = vector.extract_strided_slice %39 {offsets = [0, 0, 0], sizes = [2, 64, 64], strides = [1, 1, 1]} : vector<2x64x68xf32> to vector<2x64x64xf32>
    %41 = vector.extract_strided_slice %39 {offsets = [0, 0, 1], sizes = [2, 64, 64], strides = [1, 1, 1]} : vector<2x64x68xf32> to vector<2x64x64xf32>
    %42 = arith.addf %40, %41 : vector<2x64x64xf32>
    %43 = vector.extract_strided_slice %39 {offsets = [0, 0, 2], sizes = [2, 64, 64], strides = [1, 1, 1]} : vector<2x64x68xf32> to vector<2x64x64xf32>
    %44 = arith.addf %42, %43 : vector<2x64x64xf32>
    %45 = vector.extract_strided_slice %39 {offsets = [0, 0, 3], sizes = [2, 64, 64], strides = [1, 1, 1]} : vector<2x64x68xf32> to vector<2x64x64xf32>
    %46 = arith.addf %44, %45 : vector<2x64x64xf32>
    %47 = vector.extract_strided_slice %39 {offsets = [0, 0, 4], sizes = [2, 64, 64], strides = [1, 1, 1]} : vector<2x64x68xf32> to vector<2x64x64xf32>
    %48 = arith.addf %46, %47 : vector<2x64x64xf32>
    %49 = arith.addf %12, %24 : vector<2x64x64xf32>
    %50 = arith.addf %24, %36 : vector<2x64x64xf32>
    %51 = arith.addf %50, %48 : vector<2x64x64xf32>
    %cst_5 = arith.constant 0.0666666701 : f32
    %52 = vector.broadcast %cst_5 : f32 to vector<2x64x64xf32>
    %53 = arith.mulf %49, %52 : vector<2x64x64xf32>
    %cst_6 = arith.constant 0.0666666701 : f32
    %54 = vector.broadcast %cst_6 : f32 to vector<2x64x64xf32>
    %55 = arith.mulf %51, %54 : vector<2x64x64xf32>
    %cst_7 = arith.constant 0xFF800000 : f32
    %56 = vector.broadcast %cst_7 : f32 to vector<2x64x2xf32>
    %57 = tpu.concatenate %56, %53, %56 in 2 : vector<2x64x2xf32>, vector<2x64x64xf32>, vector<2x64x2xf32> -> vector<2x64x68xf32>
    %58 = vector.extract_strided_slice %57 {offsets = [0, 0, 0], sizes = [2, 64, 64], strides = [1, 1, 1]} : vector<2x64x68xf32> to vector<2x64x64xf32>
    %59 = vector.extract_strided_slice %57 {offsets = [0, 0, 1], sizes = [2, 64, 64], strides = [1, 1, 1]} : vector<2x64x68xf32> to vector<2x64x64xf32>
    %60 = arith.maximumf %58, %59 : vector<2x64x64xf32>
    %61 = vector.extract_strided_slice %57 {offsets = [0, 0, 2], sizes = [2, 64, 64], strides = [1, 1, 1]} : vector<2x64x68xf32> to vector<2x64x64xf32>
    %62 = arith.maximumf %60, %61 : vector<2x64x64xf32>
    %63 = vector.extract_strided_slice %57 {offsets = [0, 0, 3], sizes = [2, 64, 64], strides = [1, 1, 1]} : vector<2x64x68xf32> to vector<2x64x64xf32>
    %64 = arith.maximumf %62, %63 : vector<2x64x64xf32>
    %65 = vector.extract_strided_slice %57 {offsets = [0, 0, 4], sizes = [2, 64, 64], strides = [1, 1, 1]} : vector<2x64x68xf32> to vector<2x64x64xf32>
    %66 = arith.maximumf %64, %65 : vector<2x64x64xf32>
    %cst_8 = arith.constant 0xFF800000 : f32
    %67 = vector.broadcast %cst_8 : f32 to vector<2x64x2xf32>
    %68 = tpu.concatenate %67, %55, %67 in 2 : vector<2x64x2xf32>, vector<2x64x64xf32>, vector<2x64x2xf32> -> vector<2x64x68xf32>
    %69 = vector.extract_strided_slice %68 {offsets = [0, 0, 0], sizes = [2, 64, 64], strides = [1, 1, 1]} : vector<2x64x68xf32> to vector<2x64x64xf32>
    %70 = vector.extract_strided_slice %68 {offsets = [0, 0, 1], sizes = [2, 64, 64], strides = [1, 1, 1]} : vector<2x64x68xf32> to vector<2x64x64xf32>
    %71 = arith.maximumf %69, %70 : vector<2x64x64xf32>
    %72 = vector.extract_strided_slice %68 {offsets = [0, 0, 2], sizes = [2, 64, 64], strides = [1, 1, 1]} : vector<2x64x68xf32> to vector<2x64x64xf32>
    %73 = arith.maximumf %71, %72 : vector<2x64x64xf32>
    %74 = vector.extract_strided_slice %68 {offsets = [0, 0, 3], sizes = [2, 64, 64], strides = [1, 1, 1]} : vector<2x64x68xf32> to vector<2x64x64xf32>
    %75 = arith.maximumf %73, %74 : vector<2x64x64xf32>
    %76 = vector.extract_strided_slice %68 {offsets = [0, 0, 4], sizes = [2, 64, 64], strides = [1, 1, 1]} : vector<2x64x68xf32> to vector<2x64x64xf32>
    %77 = arith.maximumf %75, %76 : vector<2x64x64xf32>
    %78 = arith.maximumf %66, %77 : vector<2x64x64xf32>
    %79 = arith.addf %53, %78 : vector<2x64x64xf32>
    %cst_9 = arith.constant 5.000000e-01 : f32
    %80 = vector.broadcast %cst_9 : f32 to vector<2x64x64xf32>
    %81 = arith.mulf %79, %80 : vector<2x64x64xf32>
    %82 = arith.addf %55, %78 : vector<2x64x64xf32>
    %cst_10 = arith.constant 5.000000e-01 : f32
    %83 = vector.broadcast %cst_10 : f32 to vector<2x64x64xf32>
    %84 = arith.mulf %82, %83 : vector<2x64x64xf32>
    %85 = tpu.concatenate %81, %84 in 2 : vector<2x64x64xf32>, vector<2x64x64xf32> -> vector<2x64x128xf32>
    %86 = vector.extract_strided_slice %85 {offsets = [0, 0, 0], sizes = [1, 64, 128], strides = [1, 1, 1]} : vector<2x64x128xf32> to vector<1x64x128xf32>
    %87 = vector.shape_cast %86 : vector<1x64x128xf32> to vector<64x128xf32>
    %88 = vector.extract_strided_slice %85 {offsets = [1, 0, 0], sizes = [1, 64, 128], strides = [1, 1, 1]} : vector<2x64x128xf32> to vector<1x64x128xf32>
    %89 = vector.shape_cast %88 : vector<1x64x128xf32> to vector<64x128xf32>
    %90 = tpu.concatenate %87, %89 in 1 : vector<64x128xf32>, vector<64x128xf32> -> vector<64x256xf32>
    %c0_11 = arith.constant 0 : index
    %c0_12 = arith.constant 0 : index
    %91 = vector.load %arg2[%c0_11, %c0_12] : memref<128x64xf32, #tpu.memory_space<vmem>>, vector<128x64xf32>
    %cst_13 = arith.constant dense<0.000000e+00> : vector<128x256xf32>
    %92 = tpu.matmul %91, %90, %cst_13 {dimension_numbers = #tpu.dot_dimension_numbers<[1], [0], [0], [1], [0, 0, 1, 1], [], []>} : vector<128x64xf32>, vector<64x256xf32>, vector<128x256xf32> -> vector<128x256xf32>
    %c0_14 = arith.constant 0 : index
    %c0_15 = arith.constant 0 : index
    %93 = vector.load %arg3[%c0_14, %c0_15] : memref<128x3xf32, #tpu.memory_space<vmem>>, vector<128x1xf32>
    %94 = vector.broadcast %93 : vector<128x1xf32> to vector<128x256xf32>
    %95 = arith.addf %92, %94 : vector<128x256xf32>
    %cst_16 = arith.constant dense<0.000000e+00> : vector<256xf32>
    %96 = vector.multi_reduction <add>, %95, %cst_16 [0] : vector<128x256xf32> to vector<256xf32>
    %97 = vector.shape_cast %96 : vector<256xf32> to vector<1x256xf32>
    %cst_17 = arith.constant 1.280000e+02 : f32
    %98 = vector.broadcast %cst_17 : f32 to vector<1x256xf32>
    %99 = arith.divf %97, %98 : vector<1x256xf32>
    %100 = vector.broadcast %99 : vector<1x256xf32> to vector<128x256xf32>
    %101 = arith.subf %95, %100 : vector<128x256xf32>
    %102 = arith.mulf %101, %101 : vector<128x256xf32>
    %cst_18 = arith.constant dense<0.000000e+00> : vector<256xf32>
    %103 = vector.multi_reduction <add>, %102, %cst_18 [0] : vector<128x256xf32> to vector<256xf32>
    %104 = vector.shape_cast %103 : vector<256xf32> to vector<1x256xf32>
    %cst_19 = arith.constant 1.280000e+02 : f32
    %105 = vector.broadcast %cst_19 : f32 to vector<1x256xf32>
    %106 = arith.divf %104, %105 : vector<1x256xf32>
    %107 = vector.broadcast %99 : vector<1x256xf32> to vector<128x256xf32>
    %108 = arith.subf %95, %107 : vector<128x256xf32>
    %cst_20 = arith.constant 9.99999974E-6 : f32
    %109 = vector.broadcast %cst_20 : f32 to vector<1x256xf32>
    %110 = arith.addf %106, %109 : vector<1x256xf32>
    %111 = math.rsqrt %110 : vector<1x256xf32>
    %112 = vector.broadcast %111 : vector<1x256xf32> to vector<128x256xf32>
    %113 = arith.mulf %108, %112 : vector<128x256xf32>
    %c0_21 = arith.constant 0 : index
    %c1 = arith.constant 1 : index
    %114 = vector.load %arg3[%c0_21, %c1] : memref<128x3xf32, #tpu.memory_space<vmem>>, vector<128x1xf32>
    %115 = vector.broadcast %114 : vector<128x1xf32> to vector<128x256xf32>
    %116 = arith.mulf %113, %115 : vector<128x256xf32>
    %c0_22 = arith.constant 0 : index
    %c2 = arith.constant 2 : index
    %117 = vector.load %arg3[%c0_22, %c2] : memref<128x3xf32, #tpu.memory_space<vmem>>, vector<128x1xf32>
    %118 = vector.broadcast %117 : vector<128x1xf32> to vector<128x256xf32>
    %119 = arith.addf %116, %118 : vector<128x256xf32>
    %120 = vector.extract_strided_slice %119 {offsets = [0, 0], sizes = [128, 128], strides = [1, 1]} : vector<128x256xf32> to vector<128x128xf32>
    %121 = tpu.transpose %120, [1, 0] : vector<128x128xf32> -> vector<128x128xf32>
    %c0_23 = arith.constant 0 : index
    %c0_24 = arith.constant 0 : index
    %c0_25 = arith.constant 0 : index
    %122 = vector.load %arg4[%c0_23, %c0_24, %c0_25] : memref<2x128x128xf32, #tpu.memory_space<vmem>>, vector<1x128x128xf32>
    %123 = vector.shape_cast %122 : vector<1x128x128xf32> to vector<128x128xf32>
    %124 = vector.shape_cast %121 : vector<128x128xf32> to vector<1x128x128xf32>
    tpu.vector_store %arg4[%c0_23, %c0_24, %c0_25], %124 {strides = array<i32>} : memref<2x128x128xf32, #tpu.memory_space<vmem>>, vector<1x128x128xf32>,
    %125 = vector.extract_strided_slice %119 {offsets = [0, 128], sizes = [128, 128], strides = [1, 1]} : vector<128x256xf32> to vector<128x128xf32>
    %126 = tpu.transpose %125, [1, 0] : vector<128x128xf32> -> vector<128x128xf32>
    %c1_26 = arith.constant 1 : index
    %c0_27 = arith.constant 0 : index
    %c0_28 = arith.constant 0 : index
    %127 = vector.load %arg4[%c1_26, %c0_27, %c0_28] : memref<2x128x128xf32, #tpu.memory_space<vmem>>, vector<1x128x128xf32>
    %128 = vector.shape_cast %127 : vector<1x128x128xf32> to vector<128x128xf32>
    %129 = vector.shape_cast %126 : vector<128x128xf32> to vector<1x128x128xf32>
    tpu.vector_store %arg4[%c1_26, %c0_27, %c0_28], %129 {strides = array<i32>} : memref<2x128x128xf32, #tpu.memory_space<vmem>>, vector<1x128x128xf32>,
    return
  }
  func.func @transform_0(%arg0: i32) -> (i32, i32, i32) {
    %c0_i32 = arith.constant 0 : i32
    %c0_i32_0 = arith.constant 0 : i32
    %c0_i32_1 = arith.constant 0 : i32
    return %arg0, %c0_i32, %c0_i32_0 : i32, i32, i32
  }
  func.func @transform_1(%arg0: i32) -> (i32, i32) {
    %c0_i32 = arith.constant 0 : i32
    %c0_i32_0 = arith.constant 0 : i32
    %c0_i32_1 = arith.constant 0 : i32
    return %c0_i32, %c0_i32_0 : i32, i32
  }
  func.func @transform_2(%arg0: i32) -> (i32, i32) {
    %c0_i32 = arith.constant 0 : i32
    %c0_i32_0 = arith.constant 0 : i32
    %c0_i32_1 = arith.constant 0 : i32
    return %c0_i32, %c0_i32_0 : i32, i32
  }
  func.func @transform_3(%arg0: i32) -> (i32, i32, i32) {
    %c0_i32 = arith.constant 0 : i32
    %c0_i32_0 = arith.constant 0 : i32
    %c0_i32_1 = arith.constant 0 : i32
    return %arg0, %c0_i32, %c0_i32_0 : i32, i32, i32
  }
}

</mosaic_0001>

<llo_original>
// kernel: tpu_custom_call.1
$region0: #{tpu_custom_call.1}
  #allocation0 [shape = 'u32[]', space=smem, size = 0x4, offset = 0x4, fixed_abs, tag = 'smem constant byte address 0x4 - core index']
  #allocation1 [shape = 'u32[144,128]{1,0:T(1,128)}', space=vmem, size = 0x12000, scoped, tag = 'internal scratch']
  %s0 = inlined_call_operand.vmem [shape: f32[2,64,256], index: 0, kind: input, shape index: {}]
  %s1 = inlined_call_operand.vmem [shape: f32[128,64], index: 1, kind: input, shape index: {}]
  %s2 = inlined_call_operand.vmem [shape: f32[128,3], index: 2, kind: input, shape index: {}]
  %s3 = inlined_call_operand.hbm [shape: f32[2,128,128], index: 3, kind: output, shape index: {}]
  %s4 = sld [smem:[#allocation0]]
  $region22: #{tpu_custom_call.1} parent=0
    _
  %s6 = ssub.s32 1, %s4
  %s7 = scalar_select 0, %s6, %s4
  $region1: #{tpu_custom_call.1} parent=0
    #allocation2 [shape = 'u8[131072]{0}', space=vmem, size = 0x20000, scoped, tag = 'output window, operand 0, single buffered']
    #allocation3 [shape = 's32[1]{0}', space=sflag, size = 0x4, scoped, tag = 'scoped memory for tpu_custom_call.1']
    %8 = vsyncpa [#allocation3], 0
    // Predicated region
    $region2: #{tpu_custom_call.1} parent=1 // pred_check
      _
    $region3: #{tpu_custom_call.1} parent=1 // pred_check_branch
      %10 = sbr.rel (0) target = $region5
    $region4: #{tpu_custom_call.1} parent=1 // pred_region
      _
    $region5: #{tpu_custom_call.1} parent=1 // pred_fallthru
      _
    // Predicated region
    $region6: #{tpu_custom_call.1} parent=1 // pred_check
      _
    $region7: #{tpu_custom_call.1} parent=1 // pred_check_branch
      %12 = sbr.rel (0) target = $region9
    $region8: #{tpu_custom_call.1} parent=1 // pred_region
      _
    $region9: #{tpu_custom_call.1} parent=1 // pred_fallthru
      _
    // Predicated region
    $region10: #{tpu_custom_call.1} parent=1 // pred_check
      _
    $region11: #{tpu_custom_call.1} parent=1 // pred_check_branch
      %14 = sbr.rel (0) target = $region13
    $region12: #{tpu_custom_call.1} parent=1 // pred_region
      _
    $region13: #{tpu_custom_call.1} parent=1 // pred_fallthru
      _
    %v15 = vld [vmem:[%s0] sm:$0xff]
    %v16 = vld [vmem:[%s0 + $0x8] sm:$0xff]
    %v17 = vld [vmem:[%s0 + $0x10] sm:$0xff]
    %v18 = vld [vmem:[%s0 + $0x18] sm:$0xff]
    %v19 = vld [vmem:[%s0 + $0x20] sm:$0xff]
    %v20 = vld [vmem:[%s0 + $0x28] sm:$0xff]
    %v21 = vld [vmem:[%s0 + $0x30] sm:$0xff]
    %v22 = vld [vmem:[%s0 + $0x38] sm:$0xff]
    %v23 = vld [vmem:[%s0 + $0x40] sm:$0xff]
    %v24 = vld [vmem:[%s0 + $0x48] sm:$0xff]
    %v25 = vld [vmem:[%s0 + $0x50] sm:$0xff]
    %v26 = vld [vmem:[%s0 + $0x58] sm:$0xff]
    %v27 = vld [vmem:[%s0 + $0x60] sm:$0xff]
    %v28 = vld [vmem:[%s0 + $0x68] sm:$0xff]
    %v29 = vld [vmem:[%s0 + $0x70] sm:$0xff]
    %v30 = vld [vmem:[%s0 + $0x78] sm:$0xff]
    %v31 = vld [vmem:[%s0 + $0x80] sm:$0xff]
    %v32 = vld [vmem:[%s0 + $0x88] sm:$0xff]
    %v33 = vld [vmem:[%s0 + $0x90] sm:$0xff]
    %v34 = vld [vmem:[%s0 + $0x98] sm:$0xff]
    %v35 = vld [vmem:[%s0 + $0xa0] sm:$0xff]
    %v36 = vld [vmem:[%s0 + $0xa8] sm:$0xff]
    %v37 = vld [vmem:[%s0 + $0xb0] sm:$0xff]
    %v38 = vld [vmem:[%s0 + $0xb8] sm:$0xff]
    %v39 = vld [vmem:[%s0 + $0xc0] sm:$0xff]
    %v40 = vld [vmem:[%s0 + $0xc8] sm:$0xff]
    %v41 = vld [vmem:[%s0 + $0xd0] sm:$0xff]
    %v42 = vld [vmem:[%s0 + $0xd8] sm:$0xff]
    %v43 = vld [vmem:[%s0 + $0xe0] sm:$0xff]
    %v44 = vld [vmem:[%s0 + $0xe8] sm:$0xff]
    %v45 = vld [vmem:[%s0 + $0xf0] sm:$0xff]
    %v46 = vld [vmem:[%s0 + $0xf8] sm:$0xff]
    %63 = vrot.lane.b32.xlu0 %v15, 2
    %v64 = vpop.permute.xlu0 %63
    %65 = vrot.lane.b32.xlu0 %v17, 2
    %v66 = vpop.permute.xlu0 %65
    %67 = vrot.lane.b32.xlu0 %v19, 2
    %v68 = vpop.permute.xlu0 %67
    %69 = vrot.lane.b32.xlu0 %v21, 2
    %v70 = vpop.permute.xlu0 %69
    %71 = vrot.lane.b32.xlu0 %v23, 2
    %v72 = vpop.permute.xlu0 %71
    %73 = vrot.lane.b32.xlu0 %v25, 2
    %v74 = vpop.permute.xlu0 %73
    %75 = vrot.lane.b32.xlu0 %v27, 2
    %v76 = vpop.permute.xlu0 %75
    %77 = vrot.lane.b32.xlu0 %v29, 2
    %v78 = vpop.permute.xlu0 %77
    %79 = vrot.lane.b32.xlu0 %v31, 2
    %v80 = vpop.permute.xlu0 %79
    %81 = vrot.lane.b32.xlu0 %v33, 2
    %v82 = vpop.permute.xlu0 %81
    %83 = vrot.lane.b32.xlu0 %v35, 2
    %v84 = vpop.permute.xlu0 %83
    %85 = vrot.lane.b32.xlu0 %v37, 2
    %v86 = vpop.permute.xlu0 %85
    %87 = vrot.lane.b32.xlu0 %v39, 2
    %v88 = vpop.permute.xlu0 %87
    %89 = vrot.lane.b32.xlu0 %v41, 2
    %v90 = vpop.permute.xlu0 %89
    %91 = vrot.lane.b32.xlu0 %v43, 2
    %v92 = vpop.permute.xlu0 %91
    %93 = vrot.lane.b32.xlu0 %v45, 2
    %v94 = vpop.permute.xlu0 %93
    %vm111 = vcmask 15360
    %v112 = vsel %vm111, 0.0, %v64
    %v113 = vsel %vm111, 0.0, %v66
    %v114 = vsel %vm111, 0.0, %v68
    %v115 = vsel %vm111, 0.0, %v70
    %v116 = vsel %vm111, 0.0, %v72
    %v117 = vsel %vm111, 0.0, %v74
    %v118 = vsel %vm111, 0.0, %v76
    %v119 = vsel %vm111, 0.0, %v78
    %v120 = vsel %vm111, 0.0, %v80
    %v121 = vsel %vm111, 0.0, %v82
    %v122 = vsel %vm111, 0.0, %v84
    %v123 = vsel %vm111, 0.0, %v86
    %v124 = vsel %vm111, 0.0, %v88
    %v125 = vsel %vm111, 0.0, %v90
    %v126 = vsel %vm111, 0.0, %v92
    %v127 = vsel %vm111, 0.0, %v94
    %vm128 = vcmask 539648
    %v129 = vsel %vm128, %v112, 0.0
    %v130 = vsel %vm128, %v113, 0.0
    %v131 = vsel %vm128, %v114, 0.0
    %v132 = vsel %vm128, %v115, 0.0
    %v133 = vsel %vm128, %v116, 0.0
    %v134 = vsel %vm128, %v117, 0.0
    %v135 = vsel %vm128, %v118, 0.0
    %v136 = vsel %vm128, %v119, 0.0
    %v137 = vsel %vm128, %v120, 0.0
    %v138 = vsel %vm128, %v121, 0.0
    %v139 = vsel %vm128, %v122, 0.0
    %v140 = vsel %vm128, %v123, 0.0
    %v141 = vsel %vm128, %v124, 0.0
    %v142 = vsel %vm128, %v125, 0.0
    %v143 = vsel %vm128, %v126, 0.0
    %v144 = vsel %vm128, %v127, 0.0
    %161 = vrot.lane.b32.xlu0 %v129, 127
    %v162 = vpop.permute.xlu0 %161
    %163 = vrot.lane.b32.xlu0 %v130, 127
    %v164 = vpop.permute.xlu0 %163
    %165 = vrot.lane.b32.xlu0 %v131, 127
    %v166 = vpop.permute.xlu0 %165
    %167 = vrot.lane.b32.xlu0 %v132, 127
    %v168 = vpop.permute.xlu0 %167
    %169 = vrot.lane.b32.xlu0 %v133, 127
    %v170 = vpop.permute.xlu0 %169
    %171 = vrot.lane.b32.xlu0 %v134, 127
    %v172 = vpop.permute.xlu0 %171
    %173 = vrot.lane.b32.xlu0 %v135, 127
    %v174 = vpop.permute.xlu0 %173
    %175 = vrot.lane.b32.xlu0 %v136, 127
    %v176 = vpop.permute.xlu0 %175
    %177 = vrot.lane.b32.xlu0 %v137, 127
    %v178 = vpop.permute.xlu0 %177
    %179 = vrot.lane.b32.xlu0 %v138, 127
    %v180 = vpop.permute.xlu0 %179
    %181 = vrot.lane.b32.xlu0 %v139, 127
    %v182 = vpop.permute.xlu0 %181
    %183 = vrot.lane.b32.xlu0 %v140, 127
    %v184 = vpop.permute.xlu0 %183
    %185 = vrot.lane.b32.xlu0 %v141, 127
    %v186 = vpop.permute.xlu0 %185
    %187 = vrot.lane.b32.xlu0 %v142, 127
    %v188 = vpop.permute.xlu0 %187
    %189 = vrot.lane.b32.xlu0 %v143, 127
    %v190 = vpop.permute.xlu0 %189
    %191 = vrot.lane.b32.xlu0 %v144, 127
    %v192 = vpop.permute.xlu0 %191
    %v209 = vadd.f32 %v129, %v162
    %v210 = vadd.f32 %v130, %v164
    %v211 = vadd.f32 %v131, %v166
    %v212 = vadd.f32 %v132, %v168
    %v213 = vadd.f32 %v133, %v170
    %v214 = vadd.f32 %v134, %v172
    %v215 = vadd.f32 %v135, %v174
    %v216 = vadd.f32 %v136, %v176
    %v217 = vadd.f32 %v137, %v178
    %v218 = vadd.f32 %v138, %v180
    %v219 = vadd.f32 %v139, %v182
    %v220 = vadd.f32 %v140, %v184
    %v221 = vadd.f32 %v141, %v186
    %v222 = vadd.f32 %v142, %v188
    %v223 = vadd.f32 %v143, %v190
    %v224 = vadd.f32 %v144, %v192
    %225 = vrot.lane.b32.xlu0 %v129, 126
    %v226 = vpop.permute.xlu0 %225
    %227 = vrot.lane.b32.xlu0 %v130, 126
    %v228 = vpop.permute.xlu0 %227
    %229 = vrot.lane.b32.xlu0 %v131, 126
    %v230 = vpop.permute.xlu0 %229
    %231 = vrot.lane.b32.xlu0 %v132, 126
    %v232 = vpop.permute.xlu0 %231
    %233 = vrot.lane.b32.xlu0 %v133, 126
    %v234 = vpop.permute.xlu0 %233
    %235 = vrot.lane.b32.xlu0 %v134, 126
    %v236 = vpop.permute.xlu0 %235
    %237 = vrot.lane.b32.xlu0 %v135, 126
    %v238 = vpop.permute.xlu0 %237
    %239 = vrot.lane.b32.xlu0 %v136, 126
    %v240 = vpop.permute.xlu0 %239
    %241 = vrot.lane.b32.xlu0 %v137, 126
    %v242 = vpop.permute.xlu0 %241
    %243 = vrot.lane.b32.xlu0 %v138, 126
    %v244 = vpop.permute.xlu0 %243
    %245 = vrot.lane.b32.xlu0 %v139, 126
    %v246 = vpop.permute.xlu0 %245
    %247 = vrot.lane.b32.xlu0 %v140, 126
    %v248 = vpop.permute.xlu0 %247
    %249 = vrot.lane.b32.xlu0 %v141, 126
    %v250 = vpop.permute.xlu0 %249
    %251 = vrot.lane.b32.xlu0 %v142, 126
    %v252 = vpop.permute.xlu0 %251
    %253 = vrot.lane.b32.xlu0 %v143, 126
    %v254 = vpop.permute.xlu0 %253
    %255 = vrot.lane.b32.xlu0 %v144, 126
    %v256 = vpop.permute.xlu0 %255
    %v273 = vadd.f32 %v209, %v226
    %v274 = vadd.f32 %v210, %v228
    %v275 = vadd.f32 %v211, %v230
    %v276 = vadd.f32 %v212, %v232
    %v277 = vadd.f32 %v213, %v234
    %v278 = vadd.f32 %v214, %v236
    %v279 = vadd.f32 %v215, %v238
    %v280 = vadd.f32 %v216, %v240
    %v281 = vadd.f32 %v217, %v242
    %v282 = vadd.f32 %v218, %v244
    %v283 = vadd.f32 %v219, %v246
    %v284 = vadd.f32 %v220, %v248
    %v285 = vadd.f32 %v221, %v250
    %v286 = vadd.f32 %v222, %v252
    %v287 = vadd.f32 %v223, %v254
    %v288 = vadd.f32 %v224, %v256
    %289 = vrot.lane.b32.xlu0 %v129, 125
    %v290 = vpop.permute.xlu0 %289
    %291 = vrot.lane.b32.xlu0 %v130, 125
    %v292 = vpop.permute.xlu0 %291
    %293 = vrot.lane.b32.xlu0 %v131, 125
    %v294 = vpop.permute.xlu0 %293
    %295 = vrot.lane.b32.xlu0 %v132, 125
    %v296 = vpop.permute.xlu0 %295
    %297 = vrot.lane.b32.xlu0 %v133, 125
    %v298 = vpop.permute.xlu0 %297
    %299 = vrot.lane.b32.xlu0 %v134, 125
    %v300 = vpop.permute.xlu0 %299
    %301 = vrot.lane.b32.xlu0 %v135, 125
    %v302 = vpop.permute.xlu0 %301
    %303 = vrot.lane.b32.xlu0 %v136, 125
    %v304 = vpop.permute.xlu0 %303
    %305 = vrot.lane.b32.xlu0 %v137, 125
    %v306 = vpop.permute.xlu0 %305
    %307 = vrot.lane.b32.xlu0 %v138, 125
    %v308 = vpop.permute.xlu0 %307
    %309 = vrot.lane.b32.xlu0 %v139, 125
    %v310 = vpop.permute.xlu0 %309
    %311 = vrot.lane.b32.xlu0 %v140, 125
    %v312 = vpop.permute.xlu0 %311
    %313 = vrot.lane.b32.xlu0 %v141, 125
    %v314 = vpop.permute.xlu0 %313
    %315 = vrot.lane.b32.xlu0 %v142, 125
    %v316 = vpop.permute.xlu0 %315
    %317 = vrot.lane.b32.xlu0 %v143, 125
    %v318 = vpop.permute.xlu0 %317
    %319 = vrot.lane.b32.xlu0 %v144, 125
    %v320 = vpop.permute.xlu0 %319
    %v337 = vadd.f32 %v273, %v290
    %v338 = vadd.f32 %v274, %v292
    %v339 = vadd.f32 %v275, %v294
    %v340 = vadd.f32 %v276, %v296
    %v341 = vadd.f32 %v277, %v298
    %v342 = vadd.f32 %v278, %v300
    %v343 = vadd.f32 %v279, %v302
    %v344 = vadd.f32 %v280, %v304
    %v345 = vadd.f32 %v281, %v306
    %v346 = vadd.f32 %v282, %v308
    %v347 = vadd.f32 %v283, %v310
    %v348 = vadd.f32 %v284, %v312
    %v349 = vadd.f32 %v285, %v314
    %v350 = vadd.f32 %v286, %v316
    %v351 = vadd.f32 %v287, %v318
    %v352 = vadd.f32 %v288, %v320
    %353 = vrot.lane.b32.xlu0 %v129, 124
    %v354 = vpop.permute.xlu0 %353
    %355 = vrot.lane.b32.xlu0 %v130, 124
    %v356 = vpop.permute.xlu0 %355
    %357 = vrot.lane.b32.xlu0 %v131, 124
    %v358 = vpop.permute.xlu0 %357
    %359 = vrot.lane.b32.xlu0 %v132, 124
    %v360 = vpop.permute.xlu0 %359
    %361 = vrot.lane.b32.xlu0 %v133, 124
    %v362 = vpop.permute.xlu0 %361
    %363 = vrot.lane.b32.xlu0 %v134, 124
    %v364 = vpop.permute.xlu0 %363
    %365 = vrot.lane.b32.xlu0 %v135, 124
    %v366 = vpop.permute.xlu0 %365
    %367 = vrot.lane.b32.xlu0 %v136, 124
    %v368 = vpop.permute.xlu0 %367
    %369 = vrot.lane.b32.xlu0 %v137, 124
    %v370 = vpop.permute.xlu0 %369
    %371 = vrot.lane.b32.xlu0 %v138, 124
    %v372 = vpop.permute.xlu0 %371
    %373 = vrot.lane.b32.xlu0 %v139, 124
    %v374 = vpop.permute.xlu0 %373
    %375 = vrot.lane.b32.xlu0 %v140, 124
    %v376 = vpop.permute.xlu0 %375
    %377 = vrot.lane.b32.xlu0 %v141, 124
    %v378 = vpop.permute.xlu0 %377
    %379 = vrot.lane.b32.xlu0 %v142, 124
    %v380 = vpop.permute.xlu0 %379
    %381 = vrot.lane.b32.xlu0 %v143, 124
    %v382 = vpop.permute.xlu0 %381
    %383 = vrot.lane.b32.xlu0 %v144, 124
    %v384 = vpop.permute.xlu0 %383
    %v401 = vadd.f32 %v337, %v354
    %v402 = vadd.f32 %v338, %v356
    %v403 = vadd.f32 %v339, %v358
    %v404 = vadd.f32 %v340, %v360
    %v405 = vadd.f32 %v341, %v362
    %v406 = vadd.f32 %v342, %v364
    %v407 = vadd.f32 %v343, %v366
    %v408 = vadd.f32 %v344, %v368
    %v409 = vadd.f32 %v345, %v370
    %v410 = vadd.f32 %v346, %v372
    %v411 = vadd.f32 %v347, %v374
    %v412 = vadd.f32 %v348, %v376
    %v413 = vadd.f32 %v349, %v378
    %v414 = vadd.f32 %v350, %v380
    %v415 = vadd.f32 %v351, %v382
    %v416 = vadd.f32 %v352, %v384
    %417 = vrot.lane.b32.xlu0 %v15, 66
    %v418 = vpop.permute.xlu0 %417
    %419 = vrot.lane.b32.xlu0 %v17, 66
    %v420 = vpop.permute.xlu0 %419
    %421 = vrot.lane.b32.xlu0 %v19, 66
    %v422 = vpop.permute.xlu0 %421
    %423 = vrot.lane.b32.xlu0 %v21, 66
    %v424 = vpop.permute.xlu0 %423
    %425 = vrot.lane.b32.xlu0 %v23, 66
    %v426 = vpop.permute.xlu0 %425
    %427 = vrot.lane.b32.xlu0 %v25, 66
    %v428 = vpop.permute.xlu0 %427
    %429 = vrot.lane.b32.xlu0 %v27, 66
    %v430 = vpop.permute.xlu0 %429
    %431 = vrot.lane.b32.xlu0 %v29, 66
    %v432 = vpop.permute.xlu0 %431
    %433 = vrot.lane.b32.xlu0 %v31, 66
    %v434 = vpop.permute.xlu0 %433
    %435 = vrot.lane.b32.xlu0 %v33, 66
    %v436 = vpop.permute.xlu0 %435
    %437 = vrot.lane.b32.xlu0 %v35, 66
    %v438 = vpop.permute.xlu0 %437
    %439 = vrot.lane.b32.xlu0 %v37, 66
    %v440 = vpop.permute.xlu0 %439
    %441 = vrot.lane.b32.xlu0 %v39, 66
    %v442 = vpop.permute.xlu0 %441
    %443 = vrot.lane.b32.xlu0 %v41, 66
    %v444 = vpop.permute.xlu0 %443
    %445 = vrot.lane.b32.xlu0 %v43, 66
    %v446 = vpop.permute.xlu0 %445
    %447 = vrot.lane.b32.xlu0 %v45, 66
    %v448 = vpop.permute.xlu0 %447
    %v465 = vsel %vm111, 0.0, %v418
    %v466 = vsel %vm111, 0.0, %v420
    %v467 = vsel %vm111, 0.0, %v422
    %v468 = vsel %vm111, 0.0, %v424
    %v469 = vsel %vm111, 0.0, %v426
    %v470 = vsel %vm111, 0.0, %v428
    %v471 = vsel %vm111, 0.0, %v430
    %v472 = vsel %vm111, 0.0, %v432
    %v473 = vsel %vm111, 0.0, %v434
    %v474 = vsel %vm111, 0.0, %v436
    %v475 = vsel %vm111, 0.0, %v438
    %v476 = vsel %vm111, 0.0, %v440
    %v477 = vsel %vm111, 0.0, %v442
    %v478 = vsel %vm111, 0.0, %v444
    %v479 = vsel %vm111, 0.0, %v446
    %v480 = vsel %vm111, 0.0, %v448
    %v481 = vsel %vm128, %v465, 0.0
    %v482 = vsel %vm128, %v466, 0.0
    %v483 = vsel %vm128, %v467, 0.0
    %v484 = vsel %vm128, %v468, 0.0
    %v485 = vsel %vm128, %v469, 0.0
    %v486 = vsel %vm128, %v470, 0.0
    %v487 = vsel %vm128, %v471, 0.0
    %v488 = vsel %vm128, %v472, 0.0
    %v489 = vsel %vm128, %v473, 0.0
    %v490 = vsel %vm128, %v474, 0.0
    %v491 = vsel %vm128, %v475, 0.0
    %v492 = vsel %vm128, %v476, 0.0
    %v493 = vsel %vm128, %v477, 0.0
    %v494 = vsel %vm128, %v478, 0.0
    %v495 = vsel %vm128, %v479, 0.0
    %v496 = vsel %vm128, %v480, 0.0
    %513 = vrot.lane.b32.xlu0 %v481, 127
    %v514 = vpop.permute.xlu0 %513
    %515 = vrot.lane.b32.xlu0 %v482, 127
    %v516 = vpop.permute.xlu0 %515
    %517 = vrot.lane.b32.xlu0 %v483, 127
    %v518 = vpop.permute.xlu0 %517
    %519 = vrot.lane.b32.xlu0 %v484, 127
    %v520 = vpop.permute.xlu0 %519
    %521 = vrot.lane.b32.xlu0 %v485, 127
    %v522 = vpop.permute.xlu0 %521
    %523 = vrot.lane.b32.xlu0 %v486, 127
    %v524 = vpop.permute.xlu0 %523
    %525 = vrot.lane.b32.xlu0 %v487, 127
    %v526 = vpop.permute.xlu0 %525
    %527 = vrot.lane.b32.xlu0 %v488, 127
    %v528 = vpop.permute.xlu0 %527
    %529 = vrot.lane.b32.xlu0 %v489, 127
    %v530 = vpop.permute.xlu0 %529
    %531 = vrot.lane.b32.xlu0 %v490, 127
    %v532 = vpop.permute.xlu0 %531
    %533 = vrot.lane.b32.xlu0 %v491, 127
    %v534 = vpop.permute.xlu0 %533
    %535 = vrot.lane.b32.xlu0 %v492, 127
    %v536 = vpop.permute.xlu0 %535
    %537 = vrot.lane.b32.xlu0 %v493, 127
    %v538 = vpop.permute.xlu0 %537
    %539 = vrot.lane.b32.xlu0 %v494, 127
    %v540 = vpop.permute.xlu0 %539
    %541 = vrot.lane.b32.xlu0 %v495, 127
    %v542 = vpop.permute.xlu0 %541
    %543 = vrot.lane.b32.xlu0 %v496, 127
    %v544 = vpop.permute.xlu0 %543
    %v561 = vadd.f32 %v481, %v514
    %v562 = vadd.f32 %v482, %v516
    %v563 = vadd.f32 %v483, %v518
    %v564 = vadd.f32 %v484, %v520
    %v565 = vadd.f32 %v485, %v522
    %v566 = vadd.f32 %v486, %v524
    %v567 = vadd.f32 %v487, %v526
    %v568 = vadd.f32 %v488, %v528
    %v569 = vadd.f32 %v489, %v530
    %v570 = vadd.f32 %v490, %v532
    %v571 = vadd.f32 %v491, %v534
    %v572 = vadd.f32 %v492, %v536
    %v573 = vadd.f32 %v493, %v538
    %v574 = vadd.f32 %v494, %v540
    %v575 = vadd.f32 %v495, %v542
    %v576 = vadd.f32 %v496, %v544
    %577 = vrot.lane.b32.xlu0 %v481, 126
    %v578 = vpop.permute.xlu0 %577
    %579 = vrot.lane.b32.xlu0 %v482, 126
    %v580 = vpop.permute.xlu0 %579
    %581 = vrot.lane.b32.xlu0 %v483, 126
    %v582 = vpop.permute.xlu0 %581
    %583 = vrot.lane.b32.xlu0 %v484, 126
    %v584 = vpop.permute.xlu0 %583
    %585 = vrot.lane.b32.xlu0 %v485, 126
    %v586 = vpop.permute.xlu0 %585
    %587 = vrot.lane.b32.xlu0 %v486, 126
    %v588 = vpop.permute.xlu0 %587
    %589 = vrot.lane.b32.xlu0 %v487, 126
    %v590 = vpop.permute.xlu0 %589
    %591 = vrot.lane.b32.xlu0 %v488, 126
    %v592 = vpop.permute.xlu0 %591
    %593 = vrot.lane.b32.xlu0 %v489, 126
    %v594 = vpop.permute.xlu0 %593
    %595 = vrot.lane.b32.xlu0 %v490, 126
    %v596 = vpop.permute.xlu0 %595
    %597 = vrot.lane.b32.xlu0 %v491, 126
    %v598 = vpop.permute.xlu0 %597
    %599 = vrot.lane.b32.xlu0 %v492, 126
    %v600 = vpop.permute.xlu0 %599
    %601 = vrot.lane.b32.xlu0 %v493, 126
    %v602 = vpop.permute.xlu0 %601
    %603 = vrot.lane.b32.xlu0 %v494, 126
    %v604 = vpop.permute.xlu0 %603
    %605 = vrot.lane.b32.xlu0 %v495, 126
    %v606 = vpop.permute.xlu0 %605
    %607 = vrot.lane.b32.xlu0 %v496, 126
    %v608 = vpop.permute.xlu0 %607
    %v625 = vadd.f32 %v561, %v578
    %v626 = vadd.f32 %v562, %v580
    %v627 = vadd.f32 %v563, %v582
    %v628 = vadd.f32 %v564, %v584
    %v629 = vadd.f32 %v565, %v586
    %v630 = vadd.f32 %v566, %v588
    %v631 = vadd.f32 %v567, %v590
    %v632 = vadd.f32 %v568, %v592
    %v633 = vadd.f32 %v569, %v594
    %v634 = vadd.f32 %v570, %v596
    %v635 = vadd.f32 %v571, %v598
    %v636 = vadd.f32 %v572, %v600
    %v637 = vadd.f32 %v573, %v602
    %v638 = vadd.f32 %v574, %v604
    %v639 = vadd.f32 %v575, %v606
    %v640 = vadd.f32 %v576, %v608
    %641 = vrot.lane.b32.xlu0 %v481, 125
    %v642 = vpop.permute.xlu0 %641
    %643 = vrot.lane.b32.xlu0 %v482, 125
    %v644 = vpop.permute.xlu0 %643
    %645 = vrot.lane.b32.xlu0 %v483, 125
    %v646 = vpop.permute.xlu0 %645
    %647 = vrot.lane.b32.xlu0 %v484, 125
    %v648 = vpop.permute.xlu0 %647
    %649 = vrot.lane.b32.xlu0 %v485, 125
    %v650 = vpop.permute.xlu0 %649
    %651 = vrot.lane.b32.xlu0 %v486, 125
    %v652 = vpop.permute.xlu0 %651
    %653 = vrot.lane.b32.xlu0 %v487, 125
    %v654 = vpop.permute.xlu0 %653
    %655 = vrot.lane.b32.xlu0 %v488, 125
    %v656 = vpop.permute.xlu0 %655
    %657 = vrot.lane.b32.xlu0 %v489, 125
    %v658 = vpop.permute.xlu0 %657
    %659 = vrot.lane.b32.xlu0 %v490, 125
    %v660 = vpop.permute.xlu0 %659
    %661 = vrot.lane.b32.xlu0 %v491, 125
    %v662 = vpop.permute.xlu0 %661
    %663 = vrot.lane.b32.xlu0 %v492, 125
    %v664 = vpop.permute.xlu0 %663
    %665 = vrot.lane.b32.xlu0 %v493, 125
    %v666 = vpop.permute.xlu0 %665
    %667 = vrot.lane.b32.xlu0 %v494, 125
    %v668 = vpop.permute.xlu0 %667
    %669 = vrot.lane.b32.xlu0 %v495, 125
    %v670 = vpop.permute.xlu0 %669
    %671 = vrot.lane.b32.xlu0 %v496, 125
    %v672 = vpop.permute.xlu0 %671
    %v689 = vadd.f32 %v625, %v642
    %v690 = vadd.f32 %v626, %v644
    %v691 = vadd.f32 %v627, %v646
    %v692 = vadd.f32 %v628, %v648
    %v693 = vadd.f32 %v629, %v650
    %v694 = vadd.f32 %v630, %v652
    %v695 = vadd.f32 %v631, %v654
    %v696 = vadd.f32 %v632, %v656
    %v697 = vadd.f32 %v633, %v658
    %v698 = vadd.f32 %v634, %v660
    %v699 = vadd.f32 %v635, %v662
    %v700 = vadd.f32 %v636, %v664
    %v701 = vadd.f32 %v637, %v666
    %v702 = vadd.f32 %v638, %v668
    %v703 = vadd.f32 %v639, %v670
    %v704 = vadd.f32 %v640, %v672
    %705 = vrot.lane.b32.xlu0 %v481, 124
    %v706 = vpop.permute.xlu0 %705
    %707 = vrot.lane.b32.xlu0 %v482, 124
    %v708 = vpop.permute.xlu0 %707
    %709 = vrot.lane.b32.xlu0 %v483, 124
    %v710 = vpop.permute.xlu0 %709
    %711 = vrot.lane.b32.xlu0 %v484, 124
    %v712 = vpop.permute.xlu0 %711
    %713 = vrot.lane.b32.xlu0 %v485, 124
    %v714 = vpop.permute.xlu0 %713
    %715 = vrot.lane.b32.xlu0 %v486, 124
    %v716 = vpop.permute.xlu0 %715
    %717 = vrot.lane.b32.xlu0 %v487, 124
    %v718 = vpop.permute.xlu0 %717
    %719 = vrot.lane.b32.xlu0 %v488, 124
    %v720 = vpop.permute.xlu0 %719
    %721 = vrot.lane.b32.xlu0 %v489, 124
    %v722 = vpop.permute.xlu0 %721
    %723 = vrot.lane.b32.xlu0 %v490, 124
    %v724 = vpop.permute.xlu0 %723
    %725 = vrot.lane.b32.xlu0 %v491, 124
    %v726 = vpop.permute.xlu0 %725
    %727 = vrot.lane.b32.xlu0 %v492, 124
    %v728 = vpop.permute.xlu0 %727
    %729 = vrot.lane.b32.xlu0 %v493, 124
    %v730 = vpop.permute.xlu0 %729
    %731 = vrot.lane.b32.xlu0 %v494, 124
    %v732 = vpop.permute.xlu0 %731
    %733 = vrot.lane.b32.xlu0 %v495, 124
    %v734 = vpop.permute.xlu0 %733
    %735 = vrot.lane.b32.xlu0 %v496, 124
    %v736 = vpop.permute.xlu0 %735
    %v753 = vadd.f32 %v689, %v706
    %v754 = vadd.f32 %v690, %v708
    %v755 = vadd.f32 %v691, %v710
    %v756 = vadd.f32 %v692, %v712
    %v757 = vadd.f32 %v693, %v714
    %v758 = vadd.f32 %v694, %v716
    %v759 = vadd.f32 %v695, %v718
    %v760 = vadd.f32 %v696, %v720
    %v761 = vadd.f32 %v697, %v722
    %v762 = vadd.f32 %v698, %v724
    %v763 = vadd.f32 %v699, %v726
    %v764 = vadd.f32 %v700, %v728
    %v765 = vadd.f32 %v701, %v730
    %v766 = vadd.f32 %v702, %v732
    %v767 = vadd.f32 %v703, %v734
    %v768 = vadd.f32 %v704, %v736
    %785 = vrot.lane.b32.xlu0 %v16, 2
    %v786 = vpop.permute.xlu0 %785
    %787 = vrot.lane.b32.xlu0 %v18, 2
    %v788 = vpop.permute.xlu0 %787
    %789 = vrot.lane.b32.xlu0 %v20, 2
    %v790 = vpop.permute.xlu0 %789
    %791 = vrot.lane.b32.xlu0 %v22, 2
    %v792 = vpop.permute.xlu0 %791
    %793 = vrot.lane.b32.xlu0 %v24, 2
    %v794 = vpop.permute.xlu0 %793
    %795 = vrot.lane.b32.xlu0 %v26, 2
    %v796 = vpop.permute.xlu0 %795
    %797 = vrot.lane.b32.xlu0 %v28, 2
    %v798 = vpop.permute.xlu0 %797
    %799 = vrot.lane.b32.xlu0 %v30, 2
    %v800 = vpop.permute.xlu0 %799
    %801 = vrot.lane.b32.xlu0 %v32, 2
    %v802 = vpop.permute.xlu0 %801
    %803 = vrot.lane.b32.xlu0 %v34, 2
    %v804 = vpop.permute.xlu0 %803
    %805 = vrot.lane.b32.xlu0 %v36, 2
    %v806 = vpop.permute.xlu0 %805
    %807 = vrot.lane.b32.xlu0 %v38, 2
    %v808 = vpop.permute.xlu0 %807
    %809 = vrot.lane.b32.xlu0 %v40, 2
    %v810 = vpop.permute.xlu0 %809
    %811 = vrot.lane.b32.xlu0 %v42, 2
    %v812 = vpop.permute.xlu0 %811
    %813 = vrot.lane.b32.xlu0 %v44, 2
    %v814 = vpop.permute.xlu0 %813
    %815 = vrot.lane.b32.xlu0 %v46, 2
    %v816 = vpop.permute.xlu0 %815
    %v833 = vsel %vm111, 0.0, %v786
    %v834 = vsel %vm111, 0.0, %v788
    %v835 = vsel %vm111, 0.0, %v790
    %v836 = vsel %vm111, 0.0, %v792
    %v837 = vsel %vm111, 0.0, %v794
    %v838 = vsel %vm111, 0.0, %v796
    %v839 = vsel %vm111, 0.0, %v798
    %v840 = vsel %vm111, 0.0, %v800
    %v841 = vsel %vm111, 0.0, %v802
    %v842 = vsel %vm111, 0.0, %v804
    %v843 = vsel %vm111, 0.0, %v806
    %v844 = vsel %vm111, 0.0, %v808
    %v845 = vsel %vm111, 0.0, %v810
    %v846 = vsel %vm111, 0.0, %v812
    %v847 = vsel %vm111, 0.0, %v814
    %v848 = vsel %vm111, 0.0, %v816
    %v849 = vsel %vm128, %v833, 0.0
    %v850 = vsel %vm128, %v834, 0.0
    %v851 = vsel %vm128, %v835, 0.0
    %v852 = vsel %vm128, %v836, 0.0
    %v853 = vsel %vm128, %v837, 0.0
    %v854 = vsel %vm128, %v838, 0.0
    %v855 = vsel %vm128, %v839, 0.0
    %v856 = vsel %vm128, %v840, 0.0
    %v857 = vsel %vm128, %v841, 0.0
    %v858 = vsel %vm128, %v842, 0.0
    %v859 = vsel %vm128, %v843, 0.0
    %v860 = vsel %vm128, %v844, 0.0
    %v861 = vsel %vm128, %v845, 0.0
    %v862 = vsel %vm128, %v846, 0.0
    %v863 = vsel %vm128, %v847, 0.0
    %v864 = vsel %vm128, %v848, 0.0
    %881 = vrot.lane.b32.xlu0 %v849, 127
    %v882 = vpop.permute.xlu0 %881
    %883 = vrot.lane.b32.xlu0 %v850, 127
    %v884 = vpop.permute.xlu0 %883
    %885 = vrot.lane.b32.xlu0 %v851, 127
    %v886 = vpop.permute.xlu0 %885
    %887 = vrot.lane.b32.xlu0 %v852, 127
    %v888 = vpop.permute.xlu0 %887
    %889 = vrot.lane.b32.xlu0 %v853, 127
    %v890 = vpop.permute.xlu0 %889
    %891 = vrot.lane.b32.xlu0 %v854, 127
    %v892 = vpop.permute.xlu0 %891
    %893 = vrot.lane.b32.xlu0 %v855, 127
    %v894 = vpop.permute.xlu0 %893
    %895 = vrot.lane.b32.xlu0 %v856, 127
    %v896 = vpop.permute.xlu0 %895
    %897 = vrot.lane.b32.xlu0 %v857, 127
    %v898 = vpop.permute.xlu0 %897
    %899 = vrot.lane.b32.xlu0 %v858, 127
    %v900 = vpop.permute.xlu0 %899
    %901 = vrot.lane.b32.xlu0 %v859, 127
    %v902 = vpop.permute.xlu0 %901
    %903 = vrot.lane.b32.xlu0 %v860, 127
    %v904 = vpop.permute.xlu0 %903
    %905 = vrot.lane.b32.xlu0 %v861, 127
    %v906 = vpop.permute.xlu0 %905
    %907 = vrot.lane.b32.xlu0 %v862, 127
    %v908 = vpop.permute.xlu0 %907
    %909 = vrot.lane.b32.xlu0 %v863, 127
    %v910 = vpop.permute.xlu0 %909
    %911 = vrot.lane.b32.xlu0 %v864, 127
    %v912 = vpop.permute.xlu0 %911
    %v929 = vadd.f32 %v849, %v882
    %v930 = vadd.f32 %v850, %v884
    %v931 = vadd.f32 %v851, %v886
    %v932 = vadd.f32 %v852, %v888
    %v933 = vadd.f32 %v853, %v890
    %v934 = vadd.f32 %v854, %v892
    %v935 = vadd.f32 %v855, %v894
    %v936 = vadd.f32 %v856, %v896
    %v937 = vadd.f32 %v857, %v898
    %v938 = vadd.f32 %v858, %v900
    %v939 = vadd.f32 %v859, %v902
    %v940 = vadd.f32 %v860, %v904
    %v941 = vadd.f32 %v861, %v906
    %v942 = vadd.f32 %v862, %v908
    %v943 = vadd.f32 %v863, %v910
    %v944 = vadd.f32 %v864, %v912
    %945 = vrot.lane.b32.xlu0 %v849, 126
    %v946 = vpop.permute.xlu0 %945
    %947 = vrot.lane.b32.xlu0 %v850, 126
    %v948 = vpop.permute.xlu0 %947
    %949 = vrot.lane.b32.xlu0 %v851, 126
    %v950 = vpop.permute.xlu0 %949
    %951 = vrot.lane.b32.xlu0 %v852, 126
    %v952 = vpop.permute.xlu0 %951
    %953 = vrot.lane.b32.xlu0 %v853, 126
    %v954 = vpop.permute.xlu0 %953
    %955 = vrot.lane.b32.xlu0 %v854, 126
    %v956 = vpop.permute.xlu0 %955
    %957 = vrot.lane.b32.xlu0 %v855, 126
    %v958 = vpop.permute.xlu0 %957
    %959 = vrot.lane.b32.xlu0 %v856, 126
    %v960 = vpop.permute.xlu0 %959
    %961 = vrot.lane.b32.xlu0 %v857, 126
    %v962 = vpop.permute.xlu0 %961
    %963 = vrot.lane.b32.xlu0 %v858, 126
    %v964 = vpop.permute.xlu0 %963
    %965 = vrot.lane.b32.xlu0 %v859, 126
    %v966 = vpop.permute.xlu0 %965
    %967 = vrot.lane.b32.xlu0 %v860, 126
    %v968 = vpop.permute.xlu0 %967
    %969 = vrot.lane.b32.xlu0 %v861, 126
    %v970 = vpop.permute.xlu0 %969
    %971 = vrot.lane.b32.xlu0 %v862, 126
    %v972 = vpop.permute.xlu0 %971
    %973 = vrot.lane.b32.xlu0 %v863, 126
    %v974 = vpop.permute.xlu0 %973
    %975 = vrot.lane.b32.xlu0 %v864, 126
    %v976 = vpop.permute.xlu0 %975
    %v993 = vadd.f32 %v929, %v946
    %v994 = vadd.f32 %v930, %v948
    %v995 = vadd.f32 %v931, %v950
    %v996 = vadd.f32 %v932, %v952
    %v997 = vadd.f32 %v933, %v954
    %v998 = vadd.f32 %v934, %v956
    %v999 = vadd.f32 %v935, %v958
    %v1000 = vadd.f32 %v936, %v960
    %v1001 = vadd.f32 %v937, %v962
    %v1002 = vadd.f32 %v938, %v964
    %v1003 = vadd.f32 %v939, %v966
    %v1004 = vadd.f32 %v940, %v968
    %v1005 = vadd.f32 %v941, %v970
    %v1006 = vadd.f32 %v942, %v972
    %v1007 = vadd.f32 %v943, %v974
    %v1008 = vadd.f32 %v944, %v976
    %1009 = vrot.lane.b32.xlu0 %v849, 125
    %v1010 = vpop.permute.xlu0 %1009
    %1011 = vrot.lane.b32.xlu0 %v850, 125
    %v1012 = vpop.permute.xlu0 %1011
    %1013 = vrot.lane.b32.xlu0 %v851, 125
    %v1014 = vpop.permute.xlu0 %1013
    %1015 = vrot.lane.b32.xlu0 %v852, 125
    %v1016 = vpop.permute.xlu0 %1015
    %1017 = vrot.lane.b32.xlu0 %v853, 125
    %v1018 = vpop.permute.xlu0 %1017
    %1019 = vrot.lane.b32.xlu0 %v854, 125
    %v1020 = vpop.permute.xlu0 %1019
    %1021 = vrot.lane.b32.xlu0 %v855, 125
    %v1022 = vpop.permute.xlu0 %1021
    %1023 = vrot.lane.b32.xlu0 %v856, 125
    %v1024 = vpop.permute.xlu0 %1023
    %1025 = vrot.lane.b32.xlu0 %v857, 125
    %v1026 = vpop.permute.xlu0 %1025
    %1027 = vrot.lane.b32.xlu0 %v858, 125
    %v1028 = vpop.permute.xlu0 %1027
    %1029 = vrot.lane.b32.xlu0 %v859, 125
    %v1030 = vpop.permute.xlu0 %1029
    %1031 = vrot.lane.b32.xlu0 %v860, 125
    %v1032 = vpop.permute.xlu0 %1031
    %1033 = vrot.lane.b32.xlu0 %v861, 125
    %v1034 = vpop.permute.xlu0 %1033
    %1035 = vrot.lane.b32.xlu0 %v862, 125
    %v1036 = vpop.permute.xlu0 %1035
    %1037 = vrot.lane.b32.xlu0 %v863, 125
    %v1038 = vpop.permute.xlu0 %1037
    %1039 = vrot.lane.b32.xlu0 %v864, 125
    %v1040 = vpop.permute.xlu0 %1039
    %v1057 = vadd.f32 %v993, %v1010
    %v1058 = vadd.f32 %v994, %v1012
    %v1059 = vadd.f32 %v995, %v1014
    %v1060 = vadd.f32 %v996, %v1016
    %v1061 = vadd.f32 %v997, %v1018
    %v1062 = vadd.f32 %v998, %v1020
    %v1063 = vadd.f32 %v999, %v1022
    %v1064 = vadd.f32 %v1000, %v1024
    %v1065 = vadd.f32 %v1001, %v1026
    %v1066 = vadd.f32 %v1002, %v1028
    %v1067 = vadd.f32 %v1003, %v1030
    %v1068 = vadd.f32 %v1004, %v1032
    %v1069 = vadd.f32 %v1005, %v1034
    %v1070 = vadd.f32 %v1006, %v1036
    %v1071 = vadd.f32 %v1007, %v1038
    %v1072 = vadd.f32 %v1008, %v1040
    %1073 = vrot.lane.b32.xlu0 %v849, 124
    %v1074 = vpop.permute.xlu0 %1073
    %1075 = vrot.lane.b32.xlu0 %v850, 124
    %v1076 = vpop.permute.xlu0 %1075
    %1077 = vrot.lane.b32.xlu0 %v851, 124
    %v1078 = vpop.permute.xlu0 %1077
    %1079 = vrot.lane.b32.xlu0 %v852, 124
    %v1080 = vpop.permute.xlu0 %1079
    %1081 = vrot.lane.b32.xlu0 %v853, 124
    %v1082 = vpop.permute.xlu0 %1081
    %1083 = vrot.lane.b32.xlu0 %v854, 124
    %v1084 = vpop.permute.xlu0 %1083
    %1085 = vrot.lane.b32.xlu0 %v855, 124
    %v1086 = vpop.permute.xlu0 %1085
    %1087 = vrot.lane.b32.xlu0 %v856, 124
    %v1088 = vpop.permute.xlu0 %1087
    %1089 = vrot.lane.b32.xlu0 %v857, 124
    %v1090 = vpop.permute.xlu0 %1089
    %1091 = vrot.lane.b32.xlu0 %v858, 124
    %v1092 = vpop.permute.xlu0 %1091
    %1093 = vrot.lane.b32.xlu0 %v859, 124
    %v1094 = vpop.permute.xlu0 %1093
    %1095 = vrot.lane.b32.xlu0 %v860, 124
    %v1096 = vpop.permute.xlu0 %1095
    %1097 = vrot.lane.b32.xlu0 %v861, 124
    %v1098 = vpop.permute.xlu0 %1097
    %1099 = vrot.lane.b32.xlu0 %v862, 124
    %v1100 = vpop.permute.xlu0 %1099
    %1101 = vrot.lane.b32.xlu0 %v863, 124
    %v1102 = vpop.permute.xlu0 %1101
    %1103 = vrot.lane.b32.xlu0 %v864, 124
    %v1104 = vpop.permute.xlu0 %1103
    %v1121 = vadd.f32 %v1057, %v1074
    %v1122 = vadd.f32 %v1058, %v1076
    %v1123 = vadd.f32 %v1059, %v1078
    %v1124 = vadd.f32 %v1060, %v1080
    %v1125 = vadd.f32 %v1061, %v1082
    %v1126 = vadd.f32 %v1062, %v1084
    %v1127 = vadd.f32 %v1063, %v1086
    %v1128 = vadd.f32 %v1064, %v1088
    %v1129 = vadd.f32 %v1065, %v1090
    %v1130 = vadd.f32 %v1066, %v1092
    %v1131 = vadd.f32 %v1067, %v1094
    %v1132 = vadd.f32 %v1068, %v1096
    %v1133 = vadd.f32 %v1069, %v1098
    %v1134 = vadd.f32 %v1070, %v1100
    %v1135 = vadd.f32 %v1071, %v1102
    %v1136 = vadd.f32 %v1072, %v1104
    %1137 = vrot.lane.b32.xlu0 %v16, 66
    %v1138 = vpop.permute.xlu0 %1137
    %1139 = vrot.lane.b32.xlu0 %v18, 66
    %v1140 = vpop.permute.xlu0 %1139
    %1141 = vrot.lane.b32.xlu0 %v20, 66
    %v1142 = vpop.permute.xlu0 %1141
    %1143 = vrot.lane.b32.xlu0 %v22, 66
    %v1144 = vpop.permute.xlu0 %1143
    %1145 = vrot.lane.b32.xlu0 %v24, 66
    %v1146 = vpop.permute.xlu0 %1145
    %1147 = vrot.lane.b32.xlu0 %v26, 66
    %v1148 = vpop.permute.xlu0 %1147
    %1149 = vrot.lane.b32.xlu0 %v28, 66
    %v1150 = vpop.permute.xlu0 %1149
    %1151 = vrot.lane.b32.xlu0 %v30, 66
    %v1152 = vpop.permute.xlu0 %1151
    %1153 = vrot.lane.b32.xlu0 %v32, 66
    %v1154 = vpop.permute.xlu0 %1153
    %1155 = vrot.lane.b32.xlu0 %v34, 66
    %v1156 = vpop.permute.xlu0 %1155
    %1157 = vrot.lane.b32.xlu0 %v36, 66
    %v1158 = vpop.permute.xlu0 %1157
    %1159 = vrot.lane.b32.xlu0 %v38, 66
    %v1160 = vpop.permute.xlu0 %1159
    %1161 = vrot.lane.b32.xlu0 %v40, 66
    %v1162 = vpop.permute.xlu0 %1161
    %1163 = vrot.lane.b32.xlu0 %v42, 66
    %v1164 = vpop.permute.xlu0 %1163
    %1165 = vrot.lane.b32.xlu0 %v44, 66
    %v1166 = vpop.permute.xlu0 %1165
    %1167 = vrot.lane.b32.xlu0 %v46, 66
    %v1168 = vpop.permute.xlu0 %1167
    %v1185 = vsel %vm111, 0.0, %v1138
    %v1186 = vsel %vm111, 0.0, %v1140
    %v1187 = vsel %vm111, 0.0, %v1142
    %v1188 = vsel %vm111, 0.0, %v1144
    %v1189 = vsel %vm111, 0.0, %v1146
    %v1190 = vsel %vm111, 0.0, %v1148
    %v1191 = vsel %vm111, 0.0, %v1150
    %v1192 = vsel %vm111, 0.0, %v1152
    %v1193 = vsel %vm111, 0.0, %v1154
    %v1194 = vsel %vm111, 0.0, %v1156
    %v1195 = vsel %vm111, 0.0, %v1158
    %v1196 = vsel %vm111, 0.0, %v1160
    %v1197 = vsel %vm111, 0.0, %v1162
    %v1198 = vsel %vm111, 0.0, %v1164
    %v1199 = vsel %vm111, 0.0, %v1166
    %v1200 = vsel %vm111, 0.0, %v1168
    %v1201 = vsel %vm128, %v1185, 0.0
    %v1202 = vsel %vm128, %v1186, 0.0
    %v1203 = vsel %vm128, %v1187, 0.0
    %v1204 = vsel %vm128, %v1188, 0.0
    %v1205 = vsel %vm128, %v1189, 0.0
    %v1206 = vsel %vm128, %v1190, 0.0
    %v1207 = vsel %vm128, %v1191, 0.0
    %v1208 = vsel %vm128, %v1192, 0.0
    %v1209 = vsel %vm128, %v1193, 0.0
    %v1210 = vsel %vm128, %v1194, 0.0
    %v1211 = vsel %vm128, %v1195, 0.0
    %v1212 = vsel %vm128, %v1196, 0.0
    %v1213 = vsel %vm128, %v1197, 0.0
    %v1214 = vsel %vm128, %v1198, 0.0
    %v1215 = vsel %vm128, %v1199, 0.0
    %v1216 = vsel %vm128, %v1200, 0.0
    %1233 = vrot.lane.b32.xlu0 %v1201, 127
    %v1234 = vpop.permute.xlu0 %1233
    %1235 = vrot.lane.b32.xlu0 %v1202, 127
    %v1236 = vpop.permute.xlu0 %1235
    %1237 = vrot.lane.b32.xlu0 %v1203, 127
    %v1238 = vpop.permute.xlu0 %1237
    %1239 = vrot.lane.b32.xlu0 %v1204, 127
    %v1240 = vpop.permute.xlu0 %1239
    %1241 = vrot.lane.b32.xlu0 %v1205, 127
    %v1242 = vpop.permute.xlu0 %1241
    %1243 = vrot.lane.b32.xlu0 %v1206, 127
    %v1244 = vpop.permute.xlu0 %1243
    %1245 = vrot.lane.b32.xlu0 %v1207, 127
    %v1246 = vpop.permute.xlu0 %1245
    %1247 = vrot.lane.b32.xlu0 %v1208, 127
    %v1248 = vpop.permute.xlu0 %1247
    %1249 = vrot.lane.b32.xlu0 %v1209, 127
    %v1250 = vpop.permute.xlu0 %1249
    %1251 = vrot.lane.b32.xlu0 %v1210, 127
    %v1252 = vpop.permute.xlu0 %1251
    %1253 = vrot.lane.b32.xlu0 %v1211, 127
    %v1254 = vpop.permute.xlu0 %1253
    %1255 = vrot.lane.b32.xlu0 %v1212, 127
    %v1256 = vpop.permute.xlu0 %1255
    %1257 = vrot.lane.b32.xlu0 %v1213, 127
    %v1258 = vpop.permute.xlu0 %1257
    %1259 = vrot.lane.b32.xlu0 %v1214, 127
    %v1260 = vpop.permute.xlu0 %1259
    %1261 = vrot.lane.b32.xlu0 %v1215, 127
    %v1262 = vpop.permute.xlu0 %1261
    %1263 = vrot.lane.b32.xlu0 %v1216, 127
    %v1264 = vpop.permute.xlu0 %1263
    %v1281 = vadd.f32 %v1201, %v1234
    %v1282 = vadd.f32 %v1202, %v1236
    %v1283 = vadd.f32 %v1203, %v1238
    %v1284 = vadd.f32 %v1204, %v1240
    %v1285 = vadd.f32 %v1205, %v1242
    %v1286 = vadd.f32 %v1206, %v1244
    %v1287 = vadd.f32 %v1207, %v1246
    %v1288 = vadd.f32 %v1208, %v1248
    %v1289 = vadd.f32 %v1209, %v1250
    %v1290 = vadd.f32 %v1210, %v1252
    %v1291 = vadd.f32 %v1211, %v1254
    %v1292 = vadd.f32 %v1212, %v1256
    %v1293 = vadd.f32 %v1213, %v1258
    %v1294 = vadd.f32 %v1214, %v1260
    %v1295 = vadd.f32 %v1215, %v1262
    %v1296 = vadd.f32 %v1216, %v1264
    %1297 = vrot.lane.b32.xlu0 %v1201, 126
    %v1298 = vpop.permute.xlu0 %1297
    %1299 = vrot.lane.b32.xlu0 %v1202, 126
    %v1300 = vpop.permute.xlu0 %1299
    %1301 = vrot.lane.b32.xlu0 %v1203, 126
    %v1302 = vpop.permute.xlu0 %1301
    %1303 = vrot.lane.b32.xlu0 %v1204, 126
    %v1304 = vpop.permute.xlu0 %1303
    %1305 = vrot.lane.b32.xlu0 %v1205, 126
    %v1306 = vpop.permute.xlu0 %1305
    %1307 = vrot.lane.b32.xlu0 %v1206, 126
    %v1308 = vpop.permute.xlu0 %1307
    %1309 = vrot.lane.b32.xlu0 %v1207, 126
    %v1310 = vpop.permute.xlu0 %1309
    %1311 = vrot.lane.b32.xlu0 %v1208, 126
    %v1312 = vpop.permute.xlu0 %1311
    %1313 = vrot.lane.b32.xlu0 %v1209, 126
    %v1314 = vpop.permute.xlu0 %1313
    %1315 = vrot.lane.b32.xlu0 %v1210, 126
    %v1316 = vpop.permute.xlu0 %1315
    %1317 = vrot.lane.b32.xlu0 %v1211, 126
    %v1318 = vpop.permute.xlu0 %1317
    %1319 = vrot.lane.b32.xlu0 %v1212, 126
    %v1320 = vpop.permute.xlu0 %1319
    %1321 = vrot.lane.b32.xlu0 %v1213, 126
    %v1322 = vpop.permute.xlu0 %1321
    %1323 = vrot.lane.b32.xlu0 %v1214, 126
    %v1324 = vpop.permute.xlu0 %1323
    %1325 = vrot.lane.b32.xlu0 %v1215, 126
    %v1326 = vpop.permute.xlu0 %1325
    %1327 = vrot.lane.b32.xlu0 %v1216, 126
    %v1328 = vpop.permute.xlu0 %1327
    %v1345 = vadd.f32 %v1281, %v1298
    %v1346 = vadd.f32 %v1282, %v1300
    %v1347 = vadd.f32 %v1283, %v1302
    %v1348 = vadd.f32 %v1284, %v1304
    %v1349 = vadd.f32 %v1285, %v1306
    %v1350 = vadd.f32 %v1286, %v1308
    %v1351 = vadd.f32 %v1287, %v1310
    %v1352 = vadd.f32 %v1288, %v1312
    %v1353 = vadd.f32 %v1289, %v1314
    %v1354 = vadd.f32 %v1290, %v1316
    %v1355 = vadd.f32 %v1291, %v1318
    %v1356 = vadd.f32 %v1292, %v1320
    %v1357 = vadd.f32 %v1293, %v1322
    %v1358 = vadd.f32 %v1294, %v1324
    %v1359 = vadd.f32 %v1295, %v1326
    %v1360 = vadd.f32 %v1296, %v1328
    %1361 = vrot.lane.b32.xlu0 %v1201, 125
    %v1362 = vpop.permute.xlu0 %1361
    %1363 = vrot.lane.b32.xlu0 %v1202, 125
    %v1364 = vpop.permute.xlu0 %1363
    %1365 = vrot.lane.b32.xlu0 %v1203, 125
    %v1366 = vpop.permute.xlu0 %1365
    %1367 = vrot.lane.b32.xlu0 %v1204, 125
    %v1368 = vpop.permute.xlu0 %1367
    %1369 = vrot.lane.b32.xlu0 %v1205, 125
    %v1370 = vpop.permute.xlu0 %1369
    %1371 = vrot.lane.b32.xlu0 %v1206, 125
    %v1372 = vpop.permute.xlu0 %1371
    %1373 = vrot.lane.b32.xlu0 %v1207, 125
    %v1374 = vpop.permute.xlu0 %1373
    %1375 = vrot.lane.b32.xlu0 %v1208, 125
    %v1376 = vpop.permute.xlu0 %1375
    %1377 = vrot.lane.b32.xlu0 %v1209, 125
    %v1378 = vpop.permute.xlu0 %1377
    %1379 = vrot.lane.b32.xlu0 %v1210, 125
    %v1380 = vpop.permute.xlu0 %1379
    %1381 = vrot.lane.b32.xlu0 %v1211, 125
    %v1382 = vpop.permute.xlu0 %1381
    %1383 = vrot.lane.b32.xlu0 %v1212, 125
    %v1384 = vpop.permute.xlu0 %1383
    %1385 = vrot.lane.b32.xlu0 %v1213, 125
    %v1386 = vpop.permute.xlu0 %1385
    %1387 = vrot.lane.b32.xlu0 %v1214, 125
    %v1388 = vpop.permute.xlu0 %1387
    %1389 = vrot.lane.b32.xlu0 %v1215, 125
    %v1390 = vpop.permute.xlu0 %1389
    %1391 = vrot.lane.b32.xlu0 %v1216, 125
    %v1392 = vpop.permute.xlu0 %1391
    %v1409 = vadd.f32 %v1345, %v1362
    %v1410 = vadd.f32 %v1346, %v1364
    %v1411 = vadd.f32 %v1347, %v1366
    %v1412 = vadd.f32 %v1348, %v1368
    %v1413 = vadd.f32 %v1349, %v1370
    %v1414 = vadd.f32 %v1350, %v1372
    %v1415 = vadd.f32 %v1351, %v1374
    %v1416 = vadd.f32 %v1352, %v1376
    %v1417 = vadd.f32 %v1353, %v1378
    %v1418 = vadd.f32 %v1354, %v1380
    %v1419 = vadd.f32 %v1355, %v1382
    %v1420 = vadd.f32 %v1356, %v1384
    %v1421 = vadd.f32 %v1357, %v1386
    %v1422 = vadd.f32 %v1358, %v1388
    %v1423 = vadd.f32 %v1359, %v1390
    %v1424 = vadd.f32 %v1360, %v1392
    %1425 = vrot.lane.b32.xlu0 %v1201, 124
    %v1426 = vpop.permute.xlu0 %1425
    %1427 = vrot.lane.b32.xlu0 %v1202, 124
    %v1428 = vpop.permute.xlu0 %1427
    %1429 = vrot.lane.b32.xlu0 %v1203, 124
    %v1430 = vpop.permute.xlu0 %1429
    %1431 = vrot.lane.b32.xlu0 %v1204, 124
    %v1432 = vpop.permute.xlu0 %1431
    %1433 = vrot.lane.b32.xlu0 %v1205, 124
    %v1434 = vpop.permute.xlu0 %1433
    %1435 = vrot.lane.b32.xlu0 %v1206, 124
    %v1436 = vpop.permute.xlu0 %1435
    %1437 = vrot.lane.b32.xlu0 %v1207, 124
    %v1438 = vpop.permute.xlu0 %1437
    %1439 = vrot.lane.b32.xlu0 %v1208, 124
    %v1440 = vpop.permute.xlu0 %1439
    %1441 = vrot.lane.b32.xlu0 %v1209, 124
    %v1442 = vpop.permute.xlu0 %1441
    %1443 = vrot.lane.b32.xlu0 %v1210, 124
    %v1444 = vpop.permute.xlu0 %1443
    %1445 = vrot.lane.b32.xlu0 %v1211, 124
    %v1446 = vpop.permute.xlu0 %1445
    %1447 = vrot.lane.b32.xlu0 %v1212, 124
    %v1448 = vpop.permute.xlu0 %1447
    %1449 = vrot.lane.b32.xlu0 %v1213, 124
    %v1450 = vpop.permute.xlu0 %1449
    %1451 = vrot.lane.b32.xlu0 %v1214, 124
    %v1452 = vpop.permute.xlu0 %1451
    %1453 = vrot.lane.b32.xlu0 %v1215, 124
    %v1454 = vpop.permute.xlu0 %1453
    %1455 = vrot.lane.b32.xlu0 %v1216, 124
    %v1456 = vpop.permute.xlu0 %1455
    %v1473 = vadd.f32 %v1409, %v1426
    %v1474 = vadd.f32 %v1410, %v1428
    %v1475 = vadd.f32 %v1411, %v1430
    %v1476 = vadd.f32 %v1412, %v1432
    %v1477 = vadd.f32 %v1413, %v1434
    %v1478 = vadd.f32 %v1414, %v1436
    %v1479 = vadd.f32 %v1415, %v1438
    %v1480 = vadd.f32 %v1416, %v1440
    %v1481 = vadd.f32 %v1417, %v1442
    %v1482 = vadd.f32 %v1418, %v1444
    %v1483 = vadd.f32 %v1419, %v1446
    %v1484 = vadd.f32 %v1420, %v1448
    %v1485 = vadd.f32 %v1421, %v1450
    %v1486 = vadd.f32 %v1422, %v1452
    %v1487 = vadd.f32 %v1423, %v1454
    %v1488 = vadd.f32 %v1424, %v1456
    %v1489 = vadd.f32 %v401, %v753
    %v1490 = vadd.f32 %v402, %v754
    %v1491 = vadd.f32 %v403, %v755
    %v1492 = vadd.f32 %v404, %v756
    %v1493 = vadd.f32 %v405, %v757
    %v1494 = vadd.f32 %v406, %v758
    %v1495 = vadd.f32 %v407, %v759
    %v1496 = vadd.f32 %v408, %v760
    %v1497 = vadd.f32 %v409, %v761
    %v1498 = vadd.f32 %v410, %v762
    %v1499 = vadd.f32 %v411, %v763
    %v1500 = vadd.f32 %v412, %v764
    %v1501 = vadd.f32 %v413, %v765
    %v1502 = vadd.f32 %v414, %v766
    %v1503 = vadd.f32 %v415, %v767
    %v1504 = vadd.f32 %v416, %v768
    %v1505 = vadd.f32 %v753, %v1121
    %v1506 = vadd.f32 %v754, %v1122
    %v1507 = vadd.f32 %v755, %v1123
    %v1508 = vadd.f32 %v756, %v1124
    %v1509 = vadd.f32 %v757, %v1125
    %v1510 = vadd.f32 %v758, %v1126
    %v1511 = vadd.f32 %v759, %v1127
    %v1512 = vadd.f32 %v760, %v1128
    %v1513 = vadd.f32 %v761, %v1129
    %v1514 = vadd.f32 %v762, %v1130
    %v1515 = vadd.f32 %v763, %v1131
    %v1516 = vadd.f32 %v764, %v1132
    %v1517 = vadd.f32 %v765, %v1133
    %v1518 = vadd.f32 %v766, %v1134
    %v1519 = vadd.f32 %v767, %v1135
    %v1520 = vadd.f32 %v768, %v1136
    %v1521 = vadd.f32 %v1505, %v1473
    %v1522 = vadd.f32 %v1506, %v1474
    %v1523 = vadd.f32 %v1507, %v1475
    %v1524 = vadd.f32 %v1508, %v1476
    %v1525 = vadd.f32 %v1509, %v1477
    %v1526 = vadd.f32 %v1510, %v1478
    %v1527 = vadd.f32 %v1511, %v1479
    %v1528 = vadd.f32 %v1512, %v1480
    %v1529 = vadd.f32 %v1513, %v1481
    %v1530 = vadd.f32 %v1514, %v1482
    %v1531 = vadd.f32 %v1515, %v1483
    %v1532 = vadd.f32 %v1516, %v1484
    %v1533 = vadd.f32 %v1517, %v1485
    %v1534 = vadd.f32 %v1518, %v1486
    %v1535 = vadd.f32 %v1519, %v1487
    %v1536 = vadd.f32 %v1520, %v1488
    %v1537 = vmul.f32 %v1489, 0.06666667
    %v1538 = vmul.f32 %v1490, 0.06666667
    %v1539 = vmul.f32 %v1491, 0.06666667
    %v1540 = vmul.f32 %v1492, 0.06666667
    %v1541 = vmul.f32 %v1493, 0.06666667
    %v1542 = vmul.f32 %v1494, 0.06666667
    %v1543 = vmul.f32 %v1495, 0.06666667
    %v1544 = vmul.f32 %v1496, 0.06666667
    %v1545 = vmul.f32 %v1497, 0.06666667
    %v1546 = vmul.f32 %v1498, 0.06666667
    %v1547 = vmul.f32 %v1499, 0.06666667
    %v1548 = vmul.f32 %v1500, 0.06666667
    %v1549 = vmul.f32 %v1501, 0.06666667
    %v1550 = vmul.f32 %v1502, 0.06666667
    %v1551 = vmul.f32 %v1503, 0.06666667
    %v1552 = vmul.f32 %v1504, 0.06666667
    %v1553 = vmul.f32 %v1521, 0.06666667
    %v1554 = vmul.f32 %v1522, 0.06666667
    %v1555 = vmul.f32 %v1523, 0.06666667
    %v1556 = vmul.f32 %v1524, 0.06666667
    %v1557 = vmul.f32 %v1525, 0.06666667
    %v1558 = vmul.f32 %v1526, 0.06666667
    %v1559 = vmul.f32 %v1527, 0.06666667
    %v1560 = vmul.f32 %v1528, 0.06666667
    %v1561 = vmul.f32 %v1529, 0.06666667
    %v1562 = vmul.f32 %v1530, 0.06666667
    %v1563 = vmul.f32 %v1531, 0.06666667
    %v1564 = vmul.f32 %v1532, 0.06666667
    %v1565 = vmul.f32 %v1533, 0.06666667
    %v1566 = vmul.f32 %v1534, 0.06666667
    %v1567 = vmul.f32 %v1535, 0.06666667
    %v1568 = vmul.f32 %v1536, 0.06666667
    %1585 = vrot.lane.b32.xlu0 %v1537, 2
    %v1586 = vpop.permute.xlu0 %1585
    %1587 = vrot.lane.b32.xlu0 %v1538, 2
    %v1588 = vpop.permute.xlu0 %1587
    %1589 = vrot.lane.b32.xlu0 %v1539, 2
    %v1590 = vpop.permute.xlu0 %1589
    %1591 = vrot.lane.b32.xlu0 %v1540, 2
    %v1592 = vpop.permute.xlu0 %1591
    %1593 = vrot.lane.b32.xlu0 %v1541, 2
    %v1594 = vpop.permute.xlu0 %1593
    %1595 = vrot.lane.b32.xlu0 %v1542, 2
    %v1596 = vpop.permute.xlu0 %1595
    %1597 = vrot.lane.b32.xlu0 %v1543, 2
    %v1598 = vpop.permute.xlu0 %1597
    %1599 = vrot.lane.b32.xlu0 %v1544, 2
    %v1600 = vpop.permute.xlu0 %1599
    %1601 = vrot.lane.b32.xlu0 %v1545, 2
    %v1602 = vpop.permute.xlu0 %1601
    %1603 = vrot.lane.b32.xlu0 %v1546, 2
    %v1604 = vpop.permute.xlu0 %1603
    %1605 = vrot.lane.b32.xlu0 %v1547, 2
    %v1606 = vpop.permute.xlu0 %1605
    %1607 = vrot.lane.b32.xlu0 %v1548, 2
    %v1608 = vpop.permute.xlu0 %1607
    %1609 = vrot.lane.b32.xlu0 %v1549, 2
    %v1610 = vpop.permute.xlu0 %1609
    %1611 = vrot.lane.b32.xlu0 %v1550, 2
    %v1612 = vpop.permute.xlu0 %1611
    %1613 = vrot.lane.b32.xlu0 %v1551, 2
    %v1614 = vpop.permute.xlu0 %1613
    %1615 = vrot.lane.b32.xlu0 %v1552, 2
    %v1616 = vpop.permute.xlu0 %1615
    %v1633 = vsel %vm111, -inf, %v1586
    %v1634 = vsel %vm111, -inf, %v1588
    %v1635 = vsel %vm111, -inf, %v1590
    %v1636 = vsel %vm111, -inf, %v1592
    %v1637 = vsel %vm111, -inf, %v1594
    %v1638 = vsel %vm111, -inf, %v1596
    %v1639 = vsel %vm111, -inf, %v1598
    %v1640 = vsel %vm111, -inf, %v1600
    %v1641 = vsel %vm111, -inf, %v1602
    %v1642 = vsel %vm111, -inf, %v1604
    %v1643 = vsel %vm111, -inf, %v1606
    %v1644 = vsel %vm111, -inf, %v1608
    %v1645 = vsel %vm111, -inf, %v1610
    %v1646 = vsel %vm111, -inf, %v1612
    %v1647 = vsel %vm111, -inf, %v1614
    %v1648 = vsel %vm111, -inf, %v1616
    %v1649 = vsel %vm128, %v1633, -inf
    %v1650 = vsel %vm128, %v1634, -inf
    %v1651 = vsel %vm128, %v1635, -inf
    %v1652 = vsel %vm128, %v1636, -inf
    %v1653 = vsel %vm128, %v1637, -inf
    %v1654 = vsel %vm128, %v1638, -inf
    %v1655 = vsel %vm128, %v1639, -inf
    %v1656 = vsel %vm128, %v1640, -inf
    %v1657 = vsel %vm128, %v1641, -inf
    %v1658 = vsel %vm128, %v1642, -inf
    %v1659 = vsel %vm128, %v1643, -inf
    %v1660 = vsel %vm128, %v1644, -inf
    %v1661 = vsel %vm128, %v1645, -inf
    %v1662 = vsel %vm128, %v1646, -inf
    %v1663 = vsel %vm128, %v1647, -inf
    %v1664 = vsel %vm128, %v1648, -inf
    %1681 = vrot.lane.b32.xlu0 %v1649, 127
    %v1682 = vpop.permute.xlu0 %1681
    %1683 = vrot.lane.b32.xlu0 %v1650, 127
    %v1684 = vpop.permute.xlu0 %1683
    %1685 = vrot.lane.b32.xlu0 %v1651, 127
    %v1686 = vpop.permute.xlu0 %1685
    %1687 = vrot.lane.b32.xlu0 %v1652, 127
    %v1688 = vpop.permute.xlu0 %1687
    %1689 = vrot.lane.b32.xlu0 %v1653, 127
    %v1690 = vpop.permute.xlu0 %1689
    %1691 = vrot.lane.b32.xlu0 %v1654, 127
    %v1692 = vpop.permute.xlu0 %1691
    %1693 = vrot.lane.b32.xlu0 %v1655, 127
    %v1694 = vpop.permute.xlu0 %1693
    %1695 = vrot.lane.b32.xlu0 %v1656, 127
    %v1696 = vpop.permute.xlu0 %1695
    %1697 = vrot.lane.b32.xlu0 %v1657, 127
    %v1698 = vpop.permute.xlu0 %1697
    %1699 = vrot.lane.b32.xlu0 %v1658, 127
    %v1700 = vpop.permute.xlu0 %1699
    %1701 = vrot.lane.b32.xlu0 %v1659, 127
    %v1702 = vpop.permute.xlu0 %1701
    %1703 = vrot.lane.b32.xlu0 %v1660, 127
    %v1704 = vpop.permute.xlu0 %1703
    %1705 = vrot.lane.b32.xlu0 %v1661, 127
    %v1706 = vpop.permute.xlu0 %1705
    %1707 = vrot.lane.b32.xlu0 %v1662, 127
    %v1708 = vpop.permute.xlu0 %1707
    %1709 = vrot.lane.b32.xlu0 %v1663, 127
    %v1710 = vpop.permute.xlu0 %1709
    %1711 = vrot.lane.b32.xlu0 %v1664, 127
    %v1712 = vpop.permute.xlu0 %1711
    %v1729 = vmax.f32 %v1649, %v1682
    %v1730 = vmax.f32 %v1650, %v1684
    %v1731 = vmax.f32 %v1651, %v1686
    %v1732 = vmax.f32 %v1652, %v1688
    %v1733 = vmax.f32 %v1653, %v1690
    %v1734 = vmax.f32 %v1654, %v1692
    %v1735 = vmax.f32 %v1655, %v1694
    %v1736 = vmax.f32 %v1656, %v1696
    %v1737 = vmax.f32 %v1657, %v1698
    %v1738 = vmax.f32 %v1658, %v1700
    %v1739 = vmax.f32 %v1659, %v1702
    %v1740 = vmax.f32 %v1660, %v1704
    %v1741 = vmax.f32 %v1661, %v1706
    %v1742 = vmax.f32 %v1662, %v1708
    %v1743 = vmax.f32 %v1663, %v1710
    %v1744 = vmax.f32 %v1664, %v1712
    %1745 = vrot.lane.b32.xlu0 %v1649, 126
    %v1746 = vpop.permute.xlu0 %1745
    %1747 = vrot.lane.b32.xlu0 %v1650, 126
    %v1748 = vpop.permute.xlu0 %1747
    %1749 = vrot.lane.b32.xlu0 %v1651, 126
    %v1750 = vpop.permute.xlu0 %1749
    %1751 = vrot.lane.b32.xlu0 %v1652, 126
    %v1752 = vpop.permute.xlu0 %1751
    %1753 = vrot.lane.b32.xlu0 %v1653, 126
    %v1754 = vpop.permute.xlu0 %1753
    %1755 = vrot.lane.b32.xlu0 %v1654, 126
    %v1756 = vpop.permute.xlu0 %1755
    %1757 = vrot.lane.b32.xlu0 %v1655, 126
    %v1758 = vpop.permute.xlu0 %1757
    %1759 = vrot.lane.b32.xlu0 %v1656, 126
    %v1760 = vpop.permute.xlu0 %1759
    %1761 = vrot.lane.b32.xlu0 %v1657, 126
    %v1762 = vpop.permute.xlu0 %1761
    %1763 = vrot.lane.b32.xlu0 %v1658, 126
    %v1764 = vpop.permute.xlu0 %1763
    %1765 = vrot.lane.b32.xlu0 %v1659, 126
    %v1766 = vpop.permute.xlu0 %1765
    %1767 = vrot.lane.b32.xlu0 %v1660, 126
    %v1768 = vpop.permute.xlu0 %1767
    %1769 = vrot.lane.b32.xlu0 %v1661, 126
    %v1770 = vpop.permute.xlu0 %1769
    %1771 = vrot.lane.b32.xlu0 %v1662, 126
    %v1772 = vpop.permute.xlu0 %1771
    %1773 = vrot.lane.b32.xlu0 %v1663, 126
    %v1774 = vpop.permute.xlu0 %1773
    %1775 = vrot.lane.b32.xlu0 %v1664, 126
    %v1776 = vpop.permute.xlu0 %1775
    %v1793 = vmax.f32 %v1729, %v1746
    %v1794 = vmax.f32 %v1730, %v1748
    %v1795 = vmax.f32 %v1731, %v1750
    %v1796 = vmax.f32 %v1732, %v1752
    %v1797 = vmax.f32 %v1733, %v1754
    %v1798 = vmax.f32 %v1734, %v1756
    %v1799 = vmax.f32 %v1735, %v1758
    %v1800 = vmax.f32 %v1736, %v1760
    %v1801 = vmax.f32 %v1737, %v1762
    %v1802 = vmax.f32 %v1738, %v1764
    %v1803 = vmax.f32 %v1739, %v1766
    %v1804 = vmax.f32 %v1740, %v1768
    %v1805 = vmax.f32 %v1741, %v1770
    %v1806 = vmax.f32 %v1742, %v1772
    %v1807 = vmax.f32 %v1743, %v1774
    %v1808 = vmax.f32 %v1744, %v1776
    %1809 = vrot.lane.b32.xlu0 %v1649, 125
    %v1810 = vpop.permute.xlu0 %1809
    %1811 = vrot.lane.b32.xlu0 %v1650, 125
    %v1812 = vpop.permute.xlu0 %1811
    %1813 = vrot.lane.b32.xlu0 %v1651, 125
    %v1814 = vpop.permute.xlu0 %1813
    %1815 = vrot.lane.b32.xlu0 %v1652, 125
    %v1816 = vpop.permute.xlu0 %1815
    %1817 = vrot.lane.b32.xlu0 %v1653, 125
    %v1818 = vpop.permute.xlu0 %1817
    %1819 = vrot.lane.b32.xlu0 %v1654, 125
    %v1820 = vpop.permute.xlu0 %1819
    %1821 = vrot.lane.b32.xlu0 %v1655, 125
    %v1822 = vpop.permute.xlu0 %1821
    %1823 = vrot.lane.b32.xlu0 %v1656, 125
    %v1824 = vpop.permute.xlu0 %1823
    %1825 = vrot.lane.b32.xlu0 %v1657, 125
    %v1826 = vpop.permute.xlu0 %1825
    %1827 = vrot.lane.b32.xlu0 %v1658, 125
    %v1828 = vpop.permute.xlu0 %1827
    %1829 = vrot.lane.b32.xlu0 %v1659, 125
    %v1830 = vpop.permute.xlu0 %1829
    %1831 = vrot.lane.b32.xlu0 %v1660, 125
    %v1832 = vpop.permute.xlu0 %1831
    %1833 = vrot.lane.b32.xlu0 %v1661, 125
    %v1834 = vpop.permute.xlu0 %1833
    %1835 = vrot.lane.b32.xlu0 %v1662, 125
    %v1836 = vpop.permute.xlu0 %1835
    %1837 = vrot.lane.b32.xlu0 %v1663, 125
    %v1838 = vpop.permute.xlu0 %1837
    %1839 = vrot.lane.b32.xlu0 %v1664, 125
    %v1840 = vpop.permute.xlu0 %1839
    %v1857 = vmax.f32 %v1793, %v1810
    %v1858 = vmax.f32 %v1794, %v1812
    %v1859 = vmax.f32 %v1795, %v1814
    %v1860 = vmax.f32 %v1796, %v1816
    %v1861 = vmax.f32 %v1797, %v1818
    %v1862 = vmax.f32 %v1798, %v1820
    %v1863 = vmax.f32 %v1799, %v1822
    %v1864 = vmax.f32 %v1800, %v1824
    %v1865 = vmax.f32 %v1801, %v1826
    %v1866 = vmax.f32 %v1802, %v1828
    %v1867 = vmax.f32 %v1803, %v1830
    %v1868 = vmax.f32 %v1804, %v1832
    %v1869 = vmax.f32 %v1805, %v1834
    %v1870 = vmax.f32 %v1806, %v1836
    %v1871 = vmax.f32 %v1807, %v1838
    %v1872 = vmax.f32 %v1808, %v1840
    %1873 = vrot.lane.b32.xlu0 %v1649, 124
    %v1874 = vpop.permute.xlu0 %1873
    %1875 = vrot.lane.b32.xlu0 %v1650, 124
    %v1876 = vpop.permute.xlu0 %1875
    %1877 = vrot.lane.b32.xlu0 %v1651, 124
    %v1878 = vpop.permute.xlu0 %1877
    %1879 = vrot.lane.b32.xlu0 %v1652, 124
    %v1880 = vpop.permute.xlu0 %1879
    %1881 = vrot.lane.b32.xlu0 %v1653, 124
    %v1882 = vpop.permute.xlu0 %1881
    %1883 = vrot.lane.b32.xlu0 %v1654, 124
    %v1884 = vpop.permute.xlu0 %1883
    %1885 = vrot.lane.b32.xlu0 %v1655, 124
    %v1886 = vpop.permute.xlu0 %1885
    %1887 = vrot.lane.b32.xlu0 %v1656, 124
    %v1888 = vpop.permute.xlu0 %1887
    %1889 = vrot.lane.b32.xlu0 %v1657, 124
    %v1890 = vpop.permute.xlu0 %1889
    %1891 = vrot.lane.b32.xlu0 %v1658, 124
    %v1892 = vpop.permute.xlu0 %1891
    %1893 = vrot.lane.b32.xlu0 %v1659, 124
    %v1894 = vpop.permute.xlu0 %1893
    %1895 = vrot.lane.b32.xlu0 %v1660, 124
    %v1896 = vpop.permute.xlu0 %1895
    %1897 = vrot.lane.b32.xlu0 %v1661, 124
    %v1898 = vpop.permute.xlu0 %1897
    %1899 = vrot.lane.b32.xlu0 %v1662, 124
    %v1900 = vpop.permute.xlu0 %1899
    %1901 = vrot.lane.b32.xlu0 %v1663, 124
    %v1902 = vpop.permute.xlu0 %1901
    %1903 = vrot.lane.b32.xlu0 %v1664, 124
    %v1904 = vpop.permute.xlu0 %1903
    %v1921 = vmax.f32 %v1857, %v1874
    %v1922 = vmax.f32 %v1858, %v1876
    %v1923 = vmax.f32 %v1859, %v1878
    %v1924 = vmax.f32 %v1860, %v1880
    %v1925 = vmax.f32 %v1861, %v1882
    %v1926 = vmax.f32 %v1862, %v1884
    %v1927 = vmax.f32 %v1863, %v1886
    %v1928 = vmax.f32 %v1864, %v1888
    %v1929 = vmax.f32 %v1865, %v1890
    %v1930 = vmax.f32 %v1866, %v1892
    %v1931 = vmax.f32 %v1867, %v1894
    %v1932 = vmax.f32 %v1868, %v1896
    %v1933 = vmax.f32 %v1869, %v1898
    %v1934 = vmax.f32 %v1870, %v1900
    %v1935 = vmax.f32 %v1871, %v1902
    %v1936 = vmax.f32 %v1872, %v1904
    %1953 = vrot.lane.b32.xlu0 %v1553, 2
    %v1954 = vpop.permute.xlu0 %1953
    %1955 = vrot.lane.b32.xlu0 %v1554, 2
    %v1956 = vpop.permute.xlu0 %1955
    %1957 = vrot.lane.b32.xlu0 %v1555, 2
    %v1958 = vpop.permute.xlu0 %1957
    %1959 = vrot.lane.b32.xlu0 %v1556, 2
    %v1960 = vpop.permute.xlu0 %1959
    %1961 = vrot.lane.b32.xlu0 %v1557, 2
    %v1962 = vpop.permute.xlu0 %1961
    %1963 = vrot.lane.b32.xlu0 %v1558, 2
    %v1964 = vpop.permute.xlu0 %1963
    %1965 = vrot.lane.b32.xlu0 %v1559, 2
    %v1966 = vpop.permute.xlu0 %1965
    %1967 = vrot.lane.b32.xlu0 %v1560, 2
    %v1968 = vpop.permute.xlu0 %1967
    %1969 = vrot.lane.b32.xlu0 %v1561, 2
    %v1970 = vpop.permute.xlu0 %1969
    %1971 = vrot.lane.b32.xlu0 %v1562, 2
    %v1972 = vpop.permute.xlu0 %1971
    %1973 = vrot.lane.b32.xlu0 %v1563, 2
    %v1974 = vpop.permute.xlu0 %1973
    %1975 = vrot.lane.b32.xlu0 %v1564, 2
    %v1976 = vpop.permute.xlu0 %1975
    %1977 = vrot.lane.b32.xlu0 %v1565, 2
    %v1978 = vpop.permute.xlu0 %1977
    %1979 = vrot.lane.b32.xlu0 %v1566, 2
    %v1980 = vpop.permute.xlu0 %1979
    %1981 = vrot.lane.b32.xlu0 %v1567, 2
    %v1982 = vpop.permute.xlu0 %1981
    %1983 = vrot.lane.b32.xlu0 %v1568, 2
    %v1984 = vpop.permute.xlu0 %1983
    %v2001 = vsel %vm111, -inf, %v1954
    %v2002 = vsel %vm111, -inf, %v1956
    %v2003 = vsel %vm111, -inf, %v1958
    %v2004 = vsel %vm111, -inf, %v1960
    %v2005 = vsel %vm111, -inf, %v1962
    %v2006 = vsel %vm111, -inf, %v1964
    %v2007 = vsel %vm111, -inf, %v1966
    %v2008 = vsel %vm111, -inf, %v1968
    %v2009 = vsel %vm111, -inf, %v1970
    %v2010 = vsel %vm111, -inf, %v1972
    %v2011 = vsel %vm111, -inf, %v1974
    %v2012 = vsel %vm111, -inf, %v1976
    %v2013 = vsel %vm111, -inf, %v1978
    %v2014 = vsel %vm111, -inf, %v1980
    %v2015 = vsel %vm111, -inf, %v1982
    %v2016 = vsel %vm111, -inf, %v1984
    %v2017 = vsel %vm128, %v2001, -inf
    %v2018 = vsel %vm128, %v2002, -inf
    %v2019 = vsel %vm128, %v2003, -inf
    %v2020 = vsel %vm128, %v2004, -inf
    %v2021 = vsel %vm128, %v2005, -inf
    %v2022 = vsel %vm128, %v2006, -inf
    %v2023 = vsel %vm128, %v2007, -inf
    %v2024 = vsel %vm128, %v2008, -inf
    %v2025 = vsel %vm128, %v2009, -inf
    %v2026 = vsel %vm128, %v2010, -inf
    %v2027 = vsel %vm128, %v2011, -inf
    %v2028 = vsel %vm128, %v2012, -inf
    %v2029 = vsel %vm128, %v2013, -inf
    %v2030 = vsel %vm128, %v2014, -inf
    %v2031 = vsel %vm128, %v2015, -inf
    %v2032 = vsel %vm128, %v2016, -inf
    %2049 = vrot.lane.b32.xlu0 %v2017, 127
    %v2050 = vpop.permute.xlu0 %2049
    %2051 = vrot.lane.b32.xlu0 %v2018, 127
    %v2052 = vpop.permute.xlu0 %2051
    %2053 = vrot.lane.b32.xlu0 %v2019, 127
    %v2054 = vpop.permute.xlu0 %2053
    %2055 = vrot.lane.b32.xlu0 %v2020, 127
    %v2056 = vpop.permute.xlu0 %2055
    %2057 = vrot.lane.b32.xlu0 %v2021, 127
    %v2058 = vpop.permute.xlu0 %2057
    %2059 = vrot.lane.b32.xlu0 %v2022, 127
    %v2060 = vpop.permute.xlu0 %2059
    %2061 = vrot.lane.b32.xlu0 %v2023, 127
    %v2062 = vpop.permute.xlu0 %2061
    %2063 = vrot.lane.b32.xlu0 %v2024, 127
    %v2064 = vpop.permute.xlu0 %2063
    %2065 = vrot.lane.b32.xlu0 %v2025, 127
    %v2066 = vpop.permute.xlu0 %2065
    %2067 = vrot.lane.b32.xlu0 %v2026, 127
    %v2068 = vpop.permute.xlu0 %2067
    %2069 = vrot.lane.b32.xlu0 %v2027, 127
    %v2070 = vpop.permute.xlu0 %2069
    %2071 = vrot.lane.b32.xlu0 %v2028, 127
    %v2072 = vpop.permute.xlu0 %2071
    %2073 = vrot.lane.b32.xlu0 %v2029, 127
    %v2074 = vpop.permute.xlu0 %2073
    %2075 = vrot.lane.b32.xlu0 %v2030, 127
    %v2076 = vpop.permute.xlu0 %2075
    %2077 = vrot.lane.b32.xlu0 %v2031, 127
    %v2078 = vpop.permute.xlu0 %2077
    %2079 = vrot.lane.b32.xlu0 %v2032, 127
    %v2080 = vpop.permute.xlu0 %2079
    %v2097 = vmax.f32 %v2017, %v2050
    %v2098 = vmax.f32 %v2018, %v2052
    %v2099 = vmax.f32 %v2019, %v2054
    %v2100 = vmax.f32 %v2020, %v2056
    %v2101 = vmax.f32 %v2021, %v2058
    %v2102 = vmax.f32 %v2022, %v2060
    %v2103 = vmax.f32 %v2023, %v2062
    %v2104 = vmax.f32 %v2024, %v2064
    %v2105 = vmax.f32 %v2025, %v2066
    %v2106 = vmax.f32 %v2026, %v2068
    %v2107 = vmax.f32 %v2027, %v2070
    %v2108 = vmax.f32 %v2028, %v2072
    %v2109 = vmax.f32 %v2029, %v2074
    %v2110 = vmax.f32 %v2030, %v2076
    %v2111 = vmax.f32 %v2031, %v2078
    %v2112 = vmax.f32 %v2032, %v2080
    %2113 = vrot.lane.b32.xlu0 %v2017, 126
    %v2114 = vpop.permute.xlu0 %2113
    %2115 = vrot.lane.b32.xlu0 %v2018, 126
    %v2116 = vpop.permute.xlu0 %2115
    %2117 = vrot.lane.b32.xlu0 %v2019, 126
    %v2118 = vpop.permute.xlu0 %2117
    %2119 = vrot.lane.b32.xlu0 %v2020, 126
    %v2120 = vpop.permute.xlu0 %2119
    %2121 = vrot.lane.b32.xlu0 %v2021, 126
    %v2122 = vpop.permute.xlu0 %2121
    %2123 = vrot.lane.b32.xlu0 %v2022, 126
    %v2124 = vpop.permute.xlu0 %2123
    %2125 = vrot.lane.b32.xlu0 %v2023, 126
    %v2126 = vpop.permute.xlu0 %2125
    %2127 = vrot.lane.b32.xlu0 %v2024, 126
    %v2128 = vpop.permute.xlu0 %2127
    %2129 = vrot.lane.b32.xlu0 %v2025, 126
    %v2130 = vpop.permute.xlu0 %2129
    %2131 = vrot.lane.b32.xlu0 %v2026, 126
    %v2132 = vpop.permute.xlu0 %2131
    %2133 = vrot.lane.b32.xlu0 %v2027, 126
    %v2134 = vpop.permute.xlu0 %2133
    %2135 = vrot.lane.b32.xlu0 %v2028, 126
    %v2136 = vpop.permute.xlu0 %2135
    %2137 = vrot.lane.b32.xlu0 %v2029, 126
    %v2138 = vpop.permute.xlu0 %2137
    %2139 = vrot.lane.b32.xlu0 %v2030, 126
    %v2140 = vpop.permute.xlu0 %2139
    %2141 = vrot.lane.b32.xlu0 %v2031, 126
    %v2142 = vpop.permute.xlu0 %2141
    %2143 = vrot.lane.b32.xlu0 %v2032, 126
    %v2144 = vpop.permute.xlu0 %2143
    %v2161 = vmax.f32 %v2097, %v2114
    %v2162 = vmax.f32 %v2098, %v2116
    %v2163 = vmax.f32 %v2099, %v2118
    %v2164 = vmax.f32 %v2100, %v2120
    %v2165 = vmax.f32 %v2101, %v2122
    %v2166 = vmax.f32 %v2102, %v2124
    %v2167 = vmax.f32 %v2103, %v2126
    %v2168 = vmax.f32 %v2104, %v2128
    %v2169 = vmax.f32 %v2105, %v2130
    %v2170 = vmax.f32 %v2106, %v2132
    %v2171 = vmax.f32 %v2107, %v2134
    %v2172 = vmax.f32 %v2108, %v2136
    %v2173 = vmax.f32 %v2109, %v2138
    %v2174 = vmax.f32 %v2110, %v2140
    %v2175 = vmax.f32 %v2111, %v2142
    %v2176 = vmax.f32 %v2112, %v2144
    %2177 = vrot.lane.b32.xlu0 %v2017, 125
    %v2178 = vpop.permute.xlu0 %2177
    %2179 = vrot.lane.b32.xlu0 %v2018, 125
    %v2180 = vpop.permute.xlu0 %2179
    %2181 = vrot.lane.b32.xlu0 %v2019, 125
    %v2182 = vpop.permute.xlu0 %2181
    %2183 = vrot.lane.b32.xlu0 %v2020, 125
    %v2184 = vpop.permute.xlu0 %2183
    %2185 = vrot.lane.b32.xlu0 %v2021, 125
    %v2186 = vpop.permute.xlu0 %2185
    %2187 = vrot.lane.b32.xlu0 %v2022, 125
    %v2188 = vpop.permute.xlu0 %2187
    %2189 = vrot.lane.b32.xlu0 %v2023, 125
    %v2190 = vpop.permute.xlu0 %2189
    %2191 = vrot.lane.b32.xlu0 %v2024, 125
    %v2192 = vpop.permute.xlu0 %2191
    %2193 = vrot.lane.b32.xlu0 %v2025, 125
    %v2194 = vpop.permute.xlu0 %2193
    %2195 = vrot.lane.b32.xlu0 %v2026, 125
    %v2196 = vpop.permute.xlu0 %2195
    %2197 = vrot.lane.b32.xlu0 %v2027, 125
    %v2198 = vpop.permute.xlu0 %2197
    %2199 = vrot.lane.b32.xlu0 %v2028, 125
    %v2200 = vpop.permute.xlu0 %2199
    %2201 = vrot.lane.b32.xlu0 %v2029, 125
    %v2202 = vpop.permute.xlu0 %2201
    %2203 = vrot.lane.b32.xlu0 %v2030, 125
    %v2204 = vpop.permute.xlu0 %2203
    %2205 = vrot.lane.b32.xlu0 %v2031, 125
    %v2206 = vpop.permute.xlu0 %2205
    %2207 = vrot.lane.b32.xlu0 %v2032, 125
    %v2208 = vpop.permute.xlu0 %2207
    %v2225 = vmax.f32 %v2161, %v2178
    %v2226 = vmax.f32 %v2162, %v2180
    %v2227 = vmax.f32 %v2163, %v2182
    %v2228 = vmax.f32 %v2164, %v2184
    %v2229 = vmax.f32 %v2165, %v2186
    %v2230 = vmax.f32 %v2166, %v2188
    %v2231 = vmax.f32 %v2167, %v2190
    %v2232 = vmax.f32 %v2168, %v2192
    %v2233 = vmax.f32 %v2169, %v2194
    %v2234 = vmax.f32 %v2170, %v2196
    %v2235 = vmax.f32 %v2171, %v2198
    %v2236 = vmax.f32 %v2172, %v2200
    %v2237 = vmax.f32 %v2173, %v2202
    %v2238 = vmax.f32 %v2174, %v2204
    %v2239 = vmax.f32 %v2175, %v2206
    %v2240 = vmax.f32 %v2176, %v2208
    %2241 = vrot.lane.b32.xlu0 %v2017, 124
    %v2242 = vpop.permute.xlu0 %2241
    %2243 = vrot.lane.b32.xlu0 %v2018, 124
    %v2244 = vpop.permute.xlu0 %2243
    %2245 = vrot.lane.b32.xlu0 %v2019, 124
    %v2246 = vpop.permute.xlu0 %2245
    %2247 = vrot.lane.b32.xlu0 %v2020, 124
    %v2248 = vpop.permute.xlu0 %2247
    %2249 = vrot.lane.b32.xlu0 %v2021, 124
    %v2250 = vpop.permute.xlu0 %2249
    %2251 = vrot.lane.b32.xlu0 %v2022, 124
    %v2252 = vpop.permute.xlu0 %2251
    %2253 = vrot.lane.b32.xlu0 %v2023, 124
    %v2254 = vpop.permute.xlu0 %2253
    %2255 = vrot.lane.b32.xlu0 %v2024, 124
    %v2256 = vpop.permute.xlu0 %2255
    %2257 = vrot.lane.b32.xlu0 %v2025, 124
    %v2258 = vpop.permute.xlu0 %2257
    %2259 = vrot.lane.b32.xlu0 %v2026, 124
    %v2260 = vpop.permute.xlu0 %2259
    %2261 = vrot.lane.b32.xlu0 %v2027, 124
    %v2262 = vpop.permute.xlu0 %2261
    %2263 = vrot.lane.b32.xlu0 %v2028, 124
    %v2264 = vpop.permute.xlu0 %2263
    %2265 = vrot.lane.b32.xlu0 %v2029, 124
    %v2266 = vpop.permute.xlu0 %2265
    %2267 = vrot.lane.b32.xlu0 %v2030, 124
    %v2268 = vpop.permute.xlu0 %2267
    %2269 = vrot.lane.b32.xlu0 %v2031, 124
    %v2270 = vpop.permute.xlu0 %2269
    %2271 = vrot.lane.b32.xlu0 %v2032, 124
    %v2272 = vpop.permute.xlu0 %2271
    %v2289 = vmax.f32 %v2225, %v2242
    %v2290 = vmax.f32 %v2226, %v2244
    %v2291 = vmax.f32 %v2227, %v2246
    %v2292 = vmax.f32 %v2228, %v2248
    %v2293 = vmax.f32 %v2229, %v2250
    %v2294 = vmax.f32 %v2230, %v2252
    %v2295 = vmax.f32 %v2231, %v2254
    %v2296 = vmax.f32 %v2232, %v2256
    %v2297 = vmax.f32 %v2233, %v2258
    %v2298 = vmax.f32 %v2234, %v2260
    %v2299 = vmax.f32 %v2235, %v2262
    %v2300 = vmax.f32 %v2236, %v2264
    %v2301 = vmax.f32 %v2237, %v2266
    %v2302 = vmax.f32 %v2238, %v2268
    %v2303 = vmax.f32 %v2239, %v2270
    %v2304 = vmax.f32 %v2240, %v2272
    %v2305 = vmax.f32 %v1921, %v2289
    %v2306 = vmax.f32 %v1922, %v2290
    %v2307 = vmax.f32 %v1923, %v2291
    %v2308 = vmax.f32 %v1924, %v2292
    %v2309 = vmax.f32 %v1925, %v2293
    %v2310 = vmax.f32 %v1926, %v2294
    %v2311 = vmax.f32 %v1927, %v2295
    %v2312 = vmax.f32 %v1928, %v2296
    %v2313 = vmax.f32 %v1929, %v2297
    %v2314 = vmax.f32 %v1930, %v2298
    %v2315 = vmax.f32 %v1931, %v2299
    %v2316 = vmax.f32 %v1932, %v2300
    %v2317 = vmax.f32 %v1933, %v2301
    %v2318 = vmax.f32 %v1934, %v2302
    %v2319 = vmax.f32 %v1935, %v2303
    %v2320 = vmax.f32 %v1936, %v2304
    %v2321 = vadd.f32 %v1537, %v2305
    %v2322 = vadd.f32 %v1538, %v2306
    %v2323 = vadd.f32 %v1539, %v2307
    %v2324 = vadd.f32 %v1540, %v2308
    %v2325 = vadd.f32 %v1541, %v2309
    %v2326 = vadd.f32 %v1542, %v2310
    %v2327 = vadd.f32 %v1543, %v2311
    %v2328 = vadd.f32 %v1544, %v2312
    %v2329 = vadd.f32 %v1545, %v2313
    %v2330 = vadd.f32 %v1546, %v2314
    %v2331 = vadd.f32 %v1547, %v2315
    %v2332 = vadd.f32 %v1548, %v2316
    %v2333 = vadd.f32 %v1549, %v2317
    %v2334 = vadd.f32 %v1550, %v2318
    %v2335 = vadd.f32 %v1551, %v2319
    %v2336 = vadd.f32 %v1552, %v2320
    %v2337 = vmul.f32 %v2321, 0.5
    %v2338 = vmul.f32 %v2322, 0.5
    %v2339 = vmul.f32 %v2323, 0.5
    %v2340 = vmul.f32 %v2324, 0.5
    %v2341 = vmul.f32 %v2325, 0.5
    %v2342 = vmul.f32 %v2326, 0.5
    %v2343 = vmul.f32 %v2327, 0.5
    %v2344 = vmul.f32 %v2328, 0.5
    %v2345 = vmul.f32 %v2329, 0.5
    %v2346 = vmul.f32 %v2330, 0.5
    %v2347 = vmul.f32 %v2331, 0.5
    %v2348 = vmul.f32 %v2332, 0.5
    %v2349 = vmul.f32 %v2333, 0.5
    %v2350 = vmul.f32 %v2334, 0.5
    %v2351 = vmul.f32 %v2335, 0.5
    %v2352 = vmul.f32 %v2336, 0.5
    %v2353 = vadd.f32 %v1553, %v2305
    %v2354 = vadd.f32 %v1554, %v2306
    %v2355 = vadd.f32 %v1555, %v2307
    %v2356 = vadd.f32 %v1556, %v2308
    %v2357 = vadd.f32 %v1557, %v2309
    %v2358 = vadd.f32 %v1558, %v2310
    %v2359 = vadd.f32 %v1559, %v2311
    %v2360 = vadd.f32 %v1560, %v2312
    %v2361 = vadd.f32 %v1561, %v2313
    %v2362 = vadd.f32 %v1562, %v2314
    %v2363 = vadd.f32 %v1563, %v2315
    %v2364 = vadd.f32 %v1564, %v2316
    %v2365 = vadd.f32 %v1565, %v2317
    %v2366 = vadd.f32 %v1566, %v2318
    %v2367 = vadd.f32 %v1567, %v2319
    %v2368 = vadd.f32 %v1568, %v2320
    %v2369 = vmul.f32 %v2353, 0.5
    %v2370 = vmul.f32 %v2354, 0.5
    %v2371 = vmul.f32 %v2355, 0.5
    %v2372 = vmul.f32 %v2356, 0.5
    %v2373 = vmul.f32 %v2357, 0.5
    %v2374 = vmul.f32 %v2358, 0.5
    %v2375 = vmul.f32 %v2359, 0.5
    %v2376 = vmul.f32 %v2360, 0.5
    %v2377 = vmul.f32 %v2361, 0.5
    %v2378 = vmul.f32 %v2362, 0.5
    %v2379 = vmul.f32 %v2363, 0.5
    %v2380 = vmul.f32 %v2364, 0.5
    %v2381 = vmul.f32 %v2365, 0.5
    %v2382 = vmul.f32 %v2366, 0.5
    %v2383 = vmul.f32 %v2367, 0.5
    %v2384 = vmul.f32 %v2368, 0.5
    %2401 = vrot.lane.b32.xlu0 %v2369, 64
    %v2402 = vpop.permute.xlu0 %2401
    %2403 = vrot.lane.b32.xlu0 %v2370, 64
    %v2404 = vpop.permute.xlu0 %2403
    %2405 = vrot.lane.b32.xlu0 %v2371, 64
    %v2406 = vpop.permute.xlu0 %2405
    %2407 = vrot.lane.b32.xlu0 %v2372, 64
    %v2408 = vpop.permute.xlu0 %2407
    %2409 = vrot.lane.b32.xlu0 %v2373, 64
    %v2410 = vpop.permute.xlu0 %2409
    %2411 = vrot.lane.b32.xlu0 %v2374, 64
    %v2412 = vpop.permute.xlu0 %2411
    %2413 = vrot.lane.b32.xlu0 %v2375, 64
    %v2414 = vpop.permute.xlu0 %2413
    %2415 = vrot.lane.b32.xlu0 %v2376, 64
    %v2416 = vpop.permute.xlu0 %2415
    %2417 = vrot.lane.b32.xlu0 %v2377, 64
    %v2418 = vpop.permute.xlu0 %2417
    %2419 = vrot.lane.b32.xlu0 %v2378, 64
    %v2420 = vpop.permute.xlu0 %2419
    %2421 = vrot.lane.b32.xlu0 %v2379, 64
    %v2422 = vpop.permute.xlu0 %2421
    %2423 = vrot.lane.b32.xlu0 %v2380, 64
    %v2424 = vpop.permute.xlu0 %2423
    %2425 = vrot.lane.b32.xlu0 %v2381, 64
    %v2426 = vpop.permute.xlu0 %2425
    %2427 = vrot.lane.b32.xlu0 %v2382, 64
    %v2428 = vpop.permute.xlu0 %2427
    %2429 = vrot.lane.b32.xlu0 %v2383, 64
    %v2430 = vpop.permute.xlu0 %2429
    %2431 = vrot.lane.b32.xlu0 %v2384, 64
    %v2432 = vpop.permute.xlu0 %2431
    %vm2449 = vcmask 523264
    %v2450 = vsel %vm2449, %v2337, %v2402
    %v2451 = vsel %vm2449, %v2338, %v2404
    %v2452 = vsel %vm2449, %v2339, %v2406
    %v2453 = vsel %vm2449, %v2340, %v2408
    %v2454 = vsel %vm2449, %v2341, %v2410
    %v2455 = vsel %vm2449, %v2342, %v2412
    %v2456 = vsel %vm2449, %v2343, %v2414
    %v2457 = vsel %vm2449, %v2344, %v2416
    %v2458 = vsel %vm2449, %v2345, %v2418
    %v2459 = vsel %vm2449, %v2346, %v2420
    %v2460 = vsel %vm2449, %v2347, %v2422
    %v2461 = vsel %vm2449, %v2348, %v2424
    %v2462 = vsel %vm2449, %v2349, %v2426
    %v2463 = vsel %vm2449, %v2350, %v2428
    %v2464 = vsel %vm2449, %v2351, %v2430
    %v2465 = vsel %vm2449, %v2352, %v2432
    %v2466 = vld [vmem:[%s1] sm:$0xff]
    %v2467 = vld [vmem:[%s1 + $0x8] sm:$0xff]
    %v2468 = vld [vmem:[%s1 + $0x10] sm:$0xff]
    %v2469 = vld [vmem:[%s1 + $0x18] sm:$0xff]
    %v2470 = vld [vmem:[%s1 + $0x20] sm:$0xff]
    %v2471 = vld [vmem:[%s1 + $0x28] sm:$0xff]
    %v2472 = vld [vmem:[%s1 + $0x30] sm:$0xff]
    %v2473 = vld [vmem:[%s1 + $0x38] sm:$0xff]
    %v2474 = vld [vmem:[%s1 + $0x40] sm:$0xff]
    %v2475 = vld [vmem:[%s1 + $0x48] sm:$0xff]
    %v2476 = vld [vmem:[%s1 + $0x50] sm:$0xff]
    %v2477 = vld [vmem:[%s1 + $0x58] sm:$0xff]
    %v2478 = vld [vmem:[%s1 + $0x60] sm:$0xff]
    %v2479 = vld [vmem:[%s1 + $0x68] sm:$0xff]
    %v2480 = vld [vmem:[%s1 + $0x70] sm:$0xff]
    %v2481 = vld [vmem:[%s1 + $0x78] sm:$0xff]
    %v2482 = vld [vmem:[%s2] sm:$0xff]
    %v2483 = vld [vmem:[%s2 + $0x8] sm:$0xff]
    %v2484 = vld [vmem:[%s2 + $0x10] sm:$0xff]
    %v2485 = vld [vmem:[%s2 + $0x18] sm:$0xff]
    %v2486 = vld [vmem:[%s2 + $0x20] sm:$0xff]
    %v2487 = vld [vmem:[%s2 + $0x28] sm:$0xff]
    %v2488 = vld [vmem:[%s2 + $0x30] sm:$0xff]
    %v2489 = vld [vmem:[%s2 + $0x38] sm:$0xff]
    %v2490 = vld [vmem:[%s2 + $0x40] sm:$0xff]
    %v2491 = vld [vmem:[%s2 + $0x48] sm:$0xff]
    %v2492 = vld [vmem:[%s2 + $0x50] sm:$0xff]
    %v2493 = vld [vmem:[%s2 + $0x58] sm:$0xff]
    %v2494 = vld [vmem:[%s2 + $0x60] sm:$0xff]
    %v2495 = vld [vmem:[%s2 + $0x68] sm:$0xff]
    %v2496 = vld [vmem:[%s2 + $0x70] sm:$0xff]
    %v2497 = vld [vmem:[%s2 + $0x78] sm:$0xff]
    %2499 = vset.pattern.permute.xlu0 0
    %2500 = vperm.xlu0 %2499, %v2482
    %v2501 = vpop.permute.xlu0 %2500
    %2504 = vset.pattern.permute.xlu0 0
    %2505 = vperm.xlu0 %2504, %v2483
    %v2506 = vpop.permute.xlu0 %2505
    %2509 = vset.pattern.permute.xlu0 0
    %2510 = vperm.xlu0 %2509, %v2484
    %v2511 = vpop.permute.xlu0 %2510
    %2514 = vset.pattern.permute.xlu0 0
    %2515 = vperm.xlu0 %2514, %v2485
    %v2516 = vpop.permute.xlu0 %2515
    %2519 = vset.pattern.permute.xlu0 0
    %2520 = vperm.xlu0 %2519, %v2486
    %v2521 = vpop.permute.xlu0 %2520
    %2524 = vset.pattern.permute.xlu0 0
    %2525 = vperm.xlu0 %2524, %v2487
    %v2526 = vpop.permute.xlu0 %2525
    %2529 = vset.pattern.permute.xlu0 0
    %2530 = vperm.xlu0 %2529, %v2488
    %v2531 = vpop.permute.xlu0 %2530
    %2534 = vset.pattern.permute.xlu0 0
    %2535 = vperm.xlu0 %2534, %v2489
    %v2536 = vpop.permute.xlu0 %2535
    %2539 = vset.pattern.permute.xlu0 0
    %2540 = vperm.xlu0 %2539, %v2490
    %v2541 = vpop.permute.xlu0 %2540
    %2544 = vset.pattern.permute.xlu0 0
    %2545 = vperm.xlu0 %2544, %v2491
    %v2546 = vpop.permute.xlu0 %2545
    %2549 = vset.pattern.permute.xlu0 0
    %2550 = vperm.xlu0 %2549, %v2492
    %v2551 = vpop.permute.xlu0 %2550
    %2554 = vset.pattern.permute.xlu0 0
    %2555 = vperm.xlu0 %2554, %v2493
    %v2556 = vpop.permute.xlu0 %2555
    %2559 = vset.pattern.permute.xlu0 0
    %2560 = vperm.xlu0 %2559, %v2494
    %v2561 = vpop.permute.xlu0 %2560
    %2564 = vset.pattern.permute.xlu0 0
    %2565 = vperm.xlu0 %2564, %v2495
    %v2566 = vpop.permute.xlu0 %2565
    %2569 = vset.pattern.permute.xlu0 0
    %2570 = vperm.xlu0 %2569, %v2496
    %v2571 = vpop.permute.xlu0 %2570
    %2574 = vset.pattern.permute.xlu0 0
    %2575 = vperm.xlu0 %2574, %v2497
    %v2576 = vpop.permute.xlu0 %2575
    %v2579 = vsel %vm2449, %v2466, 0
    %v2582 = vsel %vm2449, %v2467, 0
    %v2585 = vsel %vm2449, %v2468, 0
    %v2588 = vsel %vm2449, %v2469, 0
    %v2591 = vsel %vm2449, %v2470, 0
    %v2594 = vsel %vm2449, %v2471, 0
    %v2597 = vsel %vm2449, %v2472, 0
    %v2600 = vsel %vm2449, %v2473, 0
    %v2603 = vsel %vm2449, %v2474, 0
    %v2606 = vsel %vm2449, %v2475, 0
    %v2609 = vsel %vm2449, %v2476, 0
    %v2612 = vsel %vm2449, %v2477, 0
    %v2615 = vsel %vm2449, %v2478, 0
    %v2618 = vsel %vm2449, %v2479, 0
    %v2621 = vsel %vm2449, %v2480, 0
    %v2624 = vsel %vm2449, %v2481, 0
    %2626 = vmatprep.subr.mxu0 %v2458
    %2627 = vmatpush1.msra.mxu0 %v2450
    %2628 = vmatprep.subr.mxu0 %v2459
    %2629 = vmatpush1.msra.mxu0 %v2451
    %2630 = vmatprep.subr.mxu0 %v2460
    %2631 = vmatpush1.msra.mxu0 %v2452
    %2632 = vmatprep.subr.mxu0 %v2461
    %2633 = vmatpush1.msra.mxu0 %v2453
    %2634 = vmatprep.subr.mxu0 %v2462
    %2635 = vmatpush1.msra.mxu0 %v2454
    %2636 = vmatprep.subr.mxu0 %v2463
    %2637 = vmatpush1.msra.mxu0 %v2455
    %2638 = vmatprep.subr.mxu0 %v2464
    %2639 = vmatpush1.msra.mxu0 %v2456
    %2640 = vmatprep.subr.mxu0 %v2465
    %2641 = vmatpush1.msra.mxu0 %v2457
    %2642 = vmatprep.subr.mxu0 0.0
    %2643 = vmatpush1.msra.mxu0 0.0
    %2644 = vmatprep.subr.mxu0 0.0
    %2645 = vmatpush1.msra.mxu0 0.0
    %2646 = vmatprep.subr.mxu0 0.0
    %2647 = vmatpush1.msra.mxu0 0.0
    %2648 = vmatprep.subr.mxu0 0.0
    %2649 = vmatpush1.msra.mxu0 0.0
    %2650 = vmatprep.subr.mxu0 0.0
    %2651 = vmatpush1.msra.mxu0 0.0
    %2652 = vmatprep.subr.mxu0 0.0
    %2653 = vmatpush1.msra.mxu0 0.0
    %2654 = vmatprep.subr.mxu0 0.0
    %2655 = vmatpush1.msra.mxu0 0.0
    %2656 = vmatprep.subr.mxu0 0.0
    %2657 = vmatpush1.msra.mxu0 0.0
    %2658 = vmatprep.subr.mxu0 0.0
    %2659 = vmatpush1.msra.mxu0 0.0
    %2660 = vmatprep.subr.mxu0 0.0
    %2661 = vmatpush1.msra.mxu0 0.0
    %2662 = vmatprep.subr.mxu0 0.0
    %2663 = vmatpush1.msra.mxu0 0.0
    %2664 = vmatprep.subr.mxu0 0.0
    %2665 = vmatpush1.msra.mxu0 0.0
    %2666 = vmatprep.subr.mxu0 0.0
    %2667 = vmatpush1.msra.mxu0 0.0
    %2668 = vmatprep.subr.mxu0 0.0
    %2669 = vmatpush1.msra.mxu0 0.0
    %2670 = vmatprep.subr.mxu0 0.0
    %2671 = vmatpush1.msra.mxu0 0.0
    %2672 = vmatprep.subr.mxu0 0.0
    %2673 = vmatpush1.msra.mxu0 0.0
    %2674 = vmatprep.subr.mxu0 0.0
    %2675 = vmatpush1.msra.mxu0 0.0
    %2676 = vmatprep.subr.mxu0 0.0
    %2677 = vmatpush1.msra.mxu0 0.0
    %2678 = vmatprep.subr.mxu0 0.0
    %2679 = vmatpush1.msra.mxu0 0.0
    %2680 = vmatprep.subr.mxu0 0.0
    %2681 = vmatpush1.msra.mxu0 0.0
    %2682 = vmatprep.subr.mxu0 0.0
    %2683 = vmatpush1.msra.mxu0 0.0
    %2684 = vmatprep.subr.mxu0 0.0
    %2685 = vmatpush1.msra.mxu0 0.0
    %2686 = vmatprep.subr.mxu0 0.0
    %2687 = vmatpush1.msra.mxu0 0.0
    %2688 = vmatprep.subr.mxu0 0.0
    %2689 = vmatpush1.msra.mxu0 0.0
    %2690 = vmatprep.mubr.f32.mxu0 0.0
    %2691 = vmatmul.mubr.f32.gmra.mrb[0].mxu0 %v2579
    %v2692 = vpop.f32.mrb[0].mxu0
    %v2693 = vadd.f32 %v2501, %v2692
    %v2694 = vpop.f32.mrb[0].mxu0
    %v2695 = vadd.f32 %v2501, %v2694
    %2696 = vmatprep.mubr.f32.mxu0 0.0
    %2697 = vmatmul.mubr.f32.gmra.mrb[0].mxu0 %v2582
    %v2698 = vpop.f32.mrb[0].mxu0
    %v2699 = vadd.f32 %v2506, %v2698
    %v2700 = vpop.f32.mrb[0].mxu0
    %v2701 = vadd.f32 %v2506, %v2700
    %2702 = vmatprep.mubr.f32.mxu0 0.0
    %2703 = vmatmul.mubr.f32.gmra.mrb[0].mxu0 %v2585
    %v2704 = vpop.f32.mrb[0].mxu0
    %v2705 = vadd.f32 %v2511, %v2704
    %v2706 = vpop.f32.mrb[0].mxu0
    %v2707 = vadd.f32 %v2511, %v2706
    %2708 = vmatprep.mubr.f32.mxu0 0.0
    %2709 = vmatmul.mubr.f32.gmra.mrb[0].mxu0 %v2588
    %v2710 = vpop.f32.mrb[0].mxu0
    %v2711 = vadd.f32 %v2516, %v2710
    %v2712 = vpop.f32.mrb[0].mxu0
    %v2713 = vadd.f32 %v2516, %v2712
    %2714 = vmatprep.mubr.f32.mxu0 0.0
    %2715 = vmatmul.mubr.f32.gmra.mrb[0].mxu0 %v2591
    %v2716 = vpop.f32.mrb[0].mxu0
    %v2717 = vadd.f32 %v2521, %v2716
    %v2718 = vpop.f32.mrb[0].mxu0
    %v2719 = vadd.f32 %v2521, %v2718
    %2720 = vmatprep.mubr.f32.mxu0 0.0
    %2721 = vmatmul.mubr.f32.gmra.mrb[0].mxu0 %v2594
    %v2722 = vpop.f32.mrb[0].mxu0
    %v2723 = vadd.f32 %v2526, %v2722
    %v2724 = vpop.f32.mrb[0].mxu0
    %v2725 = vadd.f32 %v2526, %v2724
    %2726 = vmatprep.mubr.f32.mxu0 0.0
    %2727 = vmatmul.mubr.f32.gmra.mrb[0].mxu0 %v2597
    %v2728 = vpop.f32.mrb[0].mxu0
    %v2729 = vadd.f32 %v2531, %v2728
    %v2730 = vpop.f32.mrb[0].mxu0
    %v2731 = vadd.f32 %v2531, %v2730
    %2732 = vmatprep.mubr.f32.mxu0 0.0
    %2733 = vmatmul.mubr.f32.gmra.mrb[0].mxu0 %v2600
    %v2734 = vpop.f32.mrb[0].mxu0
    %v2735 = vadd.f32 %v2536, %v2734
    %v2736 = vpop.f32.mrb[0].mxu0
    %v2737 = vadd.f32 %v2536, %v2736
    %2738 = vmatprep.mubr.f32.mxu0 0.0
    %2739 = vmatmul.mubr.f32.gmra.mrb[0].mxu0 %v2603
    %v2740 = vpop.f32.mrb[0].mxu0
    %v2741 = vadd.f32 %v2541, %v2740
    %v2742 = vpop.f32.mrb[0].mxu0
    %v2743 = vadd.f32 %v2541, %v2742
    %2744 = vmatprep.mubr.f32.mxu0 0.0
    %2745 = vmatmul.mubr.f32.gmra.mrb[0].mxu0 %v2606
    %v2746 = vpop.f32.mrb[0].mxu0
    %v2747 = vadd.f32 %v2546, %v2746
    %v2748 = vpop.f32.mrb[0].mxu0
    %v2749 = vadd.f32 %v2546, %v2748
    %2750 = vmatprep.mubr.f32.mxu0 0.0
    %2751 = vmatmul.mubr.f32.gmra.mrb[0].mxu0 %v2609
    %v2752 = vpop.f32.mrb[0].mxu0
    %v2753 = vadd.f32 %v2551, %v2752
    %v2754 = vpop.f32.mrb[0].mxu0
    %v2755 = vadd.f32 %v2551, %v2754
    %2756 = vmatprep.mubr.f32.mxu0 0.0
    %2757 = vmatmul.mubr.f32.gmra.mrb[0].mxu0 %v2612
    %v2758 = vpop.f32.mrb[0].mxu0
    %v2759 = vadd.f32 %v2556, %v2758
    %v2760 = vpop.f32.mrb[0].mxu0
    %v2761 = vadd.f32 %v2556, %v2760
    %2762 = vmatprep.mubr.f32.mxu0 0.0
    %2763 = vmatmul.mubr.f32.gmra.mrb[0].mxu0 %v2615
    %v2764 = vpop.f32.mrb[0].mxu0
    %v2765 = vadd.f32 %v2561, %v2764
    %v2766 = vpop.f32.mrb[0].mxu0
    %v2767 = vadd.f32 %v2561, %v2766
    %2768 = vmatprep.mubr.f32.mxu0 0.0
    %2769 = vmatmul.mubr.f32.gmra.mrb[0].mxu0 %v2618
    %v2770 = vpop.f32.mrb[0].mxu0
    %v2771 = vadd.f32 %v2566, %v2770
    %v2772 = vpop.f32.mrb[0].mxu0
    %v2773 = vadd.f32 %v2566, %v2772
    %2774 = vmatprep.mubr.f32.mxu0 0.0
    %2775 = vmatmul.mubr.f32.gmra.mrb[0].mxu0 %v2621
    %v2776 = vpop.f32.mrb[0].mxu0
    %v2777 = vadd.f32 %v2571, %v2776
    %v2778 = vpop.f32.mrb[0].mxu0
    %v2779 = vadd.f32 %v2571, %v2778
    %2780 = vmatprep.mubr.f32.mxu0 0.0
    %2781 = vmatmul.mubr.f32.gmra.mrb[0].mxu0 %v2624
    %v2782 = vpop.f32.mrb[0].mxu0
    %v2783 = vadd.f32 %v2576, %v2782
    %v2784 = vpop.f32.mrb[0].mxu0
    %v2785 = vadd.f32 %v2576, %v2784
    %2786 = vdwg.mxu0
    %v2787 = vadd.f32 %v2693, %v2699
    %v2788 = vadd.f32 %v2787, %v2705
    %v2789 = vadd.f32 %v2788, %v2711
    %v2790 = vadd.f32 %v2789, %v2717
    %v2791 = vadd.f32 %v2790, %v2723
    %v2792 = vadd.f32 %v2791, %v2729
    %v2793 = vadd.f32 %v2792, %v2735
    %v2794 = vadd.f32 %v2793, %v2741
    %v2795 = vadd.f32 %v2794, %v2747
    %v2796 = vadd.f32 %v2795, %v2753
    %v2797 = vadd.f32 %v2796, %v2759
    %v2798 = vadd.f32 %v2797, %v2765
    %v2799 = vadd.f32 %v2798, %v2771
    %v2800 = vadd.f32 %v2799, %v2777
    %v2801 = vadd.f32 %v2800, %v2783
    %v2802 = vrot.slane %v2801, 4
    %v2803 = vadd.f32 %v2801, %v2802
    %v2804 = vrot.slane %v2803, 2
    %v2805 = vadd.f32 %v2803, %v2804
    %v2806 = vrot.slane %v2805, 1
    %v2807 = vadd.f32 %v2805, %v2806
    %v2808 = vadd.f32 %v2695, %v2701
    %v2809 = vadd.f32 %v2808, %v2707
    %v2810 = vadd.f32 %v2809, %v2713
    %v2811 = vadd.f32 %v2810, %v2719
    %v2812 = vadd.f32 %v2811, %v2725
    %v2813 = vadd.f32 %v2812, %v2731
    %v2814 = vadd.f32 %v2813, %v2737
    %v2815 = vadd.f32 %v2814, %v2743
    %v2816 = vadd.f32 %v2815, %v2749
    %v2817 = vadd.f32 %v2816, %v2755
    %v2818 = vadd.f32 %v2817, %v2761
    %v2819 = vadd.f32 %v2818, %v2767
    %v2820 = vadd.f32 %v2819, %v2773
    %v2821 = vadd.f32 %v2820, %v2779
    %v2822 = vadd.f32 %v2821, %v2785
    %v2823 = vrot.slane %v2822, 4
    %v2824 = vadd.f32 %v2822, %v2823
    %v2825 = vrot.slane %v2824, 2
    %v2826 = vadd.f32 %v2824, %v2825
    %v2827 = vrot.slane %v2826, 1
    %v2828 = vadd.f32 %v2826, %v2827
    %v2829 = vrcp.pop 128.0
    %v2830 = vmul.f32 %v2807, %v2829
    %v2831 = vmul.f32 %v2828, %v2829
    %v2832 = vsub.f32 %v2693, %v2830
    %v2833 = vsub.f32 %v2695, %v2831
    %v2834 = vsub.f32 %v2699, %v2830
    %v2835 = vsub.f32 %v2701, %v2831
    %v2836 = vsub.f32 %v2705, %v2830
    %v2837 = vsub.f32 %v2707, %v2831
    %v2838 = vsub.f32 %v2711, %v2830
    %v2839 = vsub.f32 %v2713, %v2831
    %v2840 = vsub.f32 %v2717, %v2830
    %v2841 = vsub.f32 %v2719, %v2831
    %v2842 = vsub.f32 %v2723, %v2830
    %v2843 = vsub.f32 %v2725, %v2831
    %v2844 = vsub.f32 %v2729, %v2830
    %v2845 = vsub.f32 %v2731, %v2831
    %v2846 = vsub.f32 %v2735, %v2830
    %v2847 = vsub.f32 %v2737, %v2831
    %v2848 = vsub.f32 %v2741, %v2830
    %v2849 = vsub.f32 %v2743, %v2831
    %v2850 = vsub.f32 %v2747, %v2830
    %v2851 = vsub.f32 %v2749, %v2831
    %v2852 = vsub.f32 %v2753, %v2830
    %v2853 = vsub.f32 %v2755, %v2831
    %v2854 = vsub.f32 %v2759, %v2830
    %v2855 = vsub.f32 %v2761, %v2831
    %v2856 = vsub.f32 %v2765, %v2830
    %v2857 = vsub.f32 %v2767, %v2831
    %v2858 = vsub.f32 %v2771, %v2830
    %v2859 = vsub.f32 %v2773, %v2831
    %v2860 = vsub.f32 %v2777, %v2830
    %v2861 = vsub.f32 %v2779, %v2831
    %v2862 = vsub.f32 %v2783, %v2830
    %v2863 = vsub.f32 %v2785, %v2831
    %v2864 = vmul.f32 %v2832, %v2832
    %v2865 = vmul.f32 %v2833, %v2833
    %v2866 = vmul.f32 %v2834, %v2834
    %v2867 = vmul.f32 %v2835, %v2835
    %v2868 = vmul.f32 %v2836, %v2836
    %v2869 = vmul.f32 %v2837, %v2837
    %v2870 = vmul.f32 %v2838, %v2838
    %v2871 = vmul.f32 %v2839, %v2839
    %v2872 = vmul.f32 %v2840, %v2840
    %v2873 = vmul.f32 %v2841, %v2841
    %v2874 = vmul.f32 %v2842, %v2842
    %v2875 = vmul.f32 %v2843, %v2843
    %v2876 = vmul.f32 %v2844, %v2844
    %v2877 = vmul.f32 %v2845, %v2845
    %v2878 = vmul.f32 %v2846, %v2846
    %v2879 = vmul.f32 %v2847, %v2847
    %v2880 = vmul.f32 %v2848, %v2848
    %v2881 = vmul.f32 %v2849, %v2849
    %v2882 = vmul.f32 %v2850, %v2850
    %v2883 = vmul.f32 %v2851, %v2851
    %v2884 = vmul.f32 %v2852, %v2852
    %v2885 = vmul.f32 %v2853, %v2853
    %v2886 = vmul.f32 %v2854, %v2854
    %v2887 = vmul.f32 %v2855, %v2855
    %v2888 = vmul.f32 %v2856, %v2856
    %v2889 = vmul.f32 %v2857, %v2857
    %v2890 = vmul.f32 %v2858, %v2858
    %v2891 = vmul.f32 %v2859, %v2859
    %v2892 = vmul.f32 %v2860, %v2860
    %v2893 = vmul.f32 %v2861, %v2861
    %v2894 = vmul.f32 %v2862, %v2862
    %v2895 = vmul.f32 %v2863, %v2863
    %v2896 = vadd.f32 %v2864, %v2866
    %v2897 = vadd.f32 %v2896, %v2868
    %v2898 = vadd.f32 %v2897, %v2870
    %v2899 = vadd.f32 %v2898, %v2872
    %v2900 = vadd.f32 %v2899, %v2874
    %v2901 = vadd.f32 %v2900, %v2876
    %v2902 = vadd.f32 %v2901, %v2878
    %v2903 = vadd.f32 %v2902, %v2880
    %v2904 = vadd.f32 %v2903, %v2882
    %v2905 = vadd.f32 %v2904, %v2884
    %v2906 = vadd.f32 %v2905, %v2886
    %v2907 = vadd.f32 %v2906, %v2888
    %v2908 = vadd.f32 %v2907, %v2890
    %v2909 = vadd.f32 %v2908, %v2892
    %v2910 = vadd.f32 %v2909, %v2894
    %v2911 = vrot.slane %v2910, 4
    %v2912 = vadd.f32 %v2910, %v2911
    %v2913 = vrot.slane %v2912, 2
    %v2914 = vadd.f32 %v2912, %v2913
    %v2915 = vrot.slane %v2914, 1
    %v2916 = vadd.f32 %v2914, %v2915
    %v2917 = vadd.f32 %v2865, %v2867
    %v2918 = vadd.f32 %v2917, %v2869
    %v2919 = vadd.f32 %v2918, %v2871
    %v2920 = vadd.f32 %v2919, %v2873
    %v2921 = vadd.f32 %v2920, %v2875
    %v2922 = vadd.f32 %v2921, %v2877
    %v2923 = vadd.f32 %v2922, %v2879
    %v2924 = vadd.f32 %v2923, %v2881
    %v2925 = vadd.f32 %v2924, %v2883
    %v2926 = vadd.f32 %v2925, %v2885
    %v2927 = vadd.f32 %v2926, %v2887
    %v2928 = vadd.f32 %v2927, %v2889
    %v2929 = vadd.f32 %v2928, %v2891
    %v2930 = vadd.f32 %v2929, %v2893
    %v2931 = vadd.f32 %v2930, %v2895
    %v2932 = vrot.slane %v2931, 4
    %v2933 = vadd.f32 %v2931, %v2932
    %v2934 = vrot.slane %v2933, 2
    %v2935 = vadd.f32 %v2933, %v2934
    %v2936 = vrot.slane %v2935, 1
    %v2937 = vadd.f32 %v2935, %v2936
    %v2938 = vmul.f32 %v2916, %v2829
    %v2939 = vmul.f32 %v2937, %v2829
    %v2940 = vadd.f32 %v2938, 1e-05
    %v2941 = vadd.f32 %v2939, 1e-05
    %v2942 = vrsqrt.pop %v2940
    %v2943 = vrsqrt.pop %v2941
    %v2944 = vmul.f32 %v2832, %v2942
    %v2945 = vmul.f32 %v2833, %v2943
    %v2946 = vmul.f32 %v2834, %v2942
    %v2947 = vmul.f32 %v2835, %v2943
    %v2948 = vmul.f32 %v2836, %v2942
    %v2949 = vmul.f32 %v2837, %v2943
    %v2950 = vmul.f32 %v2838, %v2942
    %v2951 = vmul.f32 %v2839, %v2943
    %v2952 = vmul.f32 %v2840, %v2942
    %v2953 = vmul.f32 %v2841, %v2943
    %v2954 = vmul.f32 %v2842, %v2942
    %v2955 = vmul.f32 %v2843, %v2943
    %v2956 = vmul.f32 %v2844, %v2942
    %v2957 = vmul.f32 %v2845, %v2943
    %v2958 = vmul.f32 %v2846, %v2942
    %v2959 = vmul.f32 %v2847, %v2943
    %v2960 = vmul.f32 %v2848, %v2942
    %v2961 = vmul.f32 %v2849, %v2943
    %v2962 = vmul.f32 %v2850, %v2942
    %v2963 = vmul.f32 %v2851, %v2943
    %v2964 = vmul.f32 %v2852, %v2942
    %v2965 = vmul.f32 %v2853, %v2943
    %v2966 = vmul.f32 %v2854, %v2942
    %v2967 = vmul.f32 %v2855, %v2943
    %v2968 = vmul.f32 %v2856, %v2942
    %v2969 = vmul.f32 %v2857, %v2943
    %v2970 = vmul.f32 %v2858, %v2942
    %v2971 = vmul.f32 %v2859, %v2943
    %v2972 = vmul.f32 %v2860, %v2942
    %v2973 = vmul.f32 %v2861, %v2943
    %v2974 = vmul.f32 %v2862, %v2942
    %v2975 = vmul.f32 %v2863, %v2943
    %2976 = vset.pattern.permute.xlu0 1
    %2977 = vperm.xlu0 %2976, %v2482
    %v2978 = vpop.permute.xlu0 %2977
    %2980 = vset.pattern.permute.xlu0 1
    %2981 = vperm.xlu0 %2980, %v2483
    %v2982 = vpop.permute.xlu0 %2981
    %2984 = vset.pattern.permute.xlu0 1
    %2985 = vperm.xlu0 %2984, %v2484
    %v2986 = vpop.permute.xlu0 %2985
    %2988 = vset.pattern.permute.xlu0 1
    %2989 = vperm.xlu0 %2988, %v2485
    %v2990 = vpop.permute.xlu0 %2989
    %2992 = vset.pattern.permute.xlu0 1
    %2993 = vperm.xlu0 %2992, %v2486
    %v2994 = vpop.permute.xlu0 %2993
    %2996 = vset.pattern.permute.xlu0 1
    %2997 = vperm.xlu0 %2996, %v2487
    %v2998 = vpop.permute.xlu0 %2997
    %3000 = vset.pattern.permute.xlu0 1
    %3001 = vperm.xlu0 %3000, %v2488
    %v3002 = vpop.permute.xlu0 %3001
    %3004 = vset.pattern.permute.xlu0 1
    %3005 = vperm.xlu0 %3004, %v2489
    %v3006 = vpop.permute.xlu0 %3005
    %3008 = vset.pattern.permute.xlu0 1
    %3009 = vperm.xlu0 %3008, %v2490
    %v3010 = vpop.permute.xlu0 %3009
    %3012 = vset.pattern.permute.xlu0 1
    %3013 = vperm.xlu0 %3012, %v2491
    %v3014 = vpop.permute.xlu0 %3013
    %3016 = vset.pattern.permute.xlu0 1
    %3017 = vperm.xlu0 %3016, %v2492
    %v3018 = vpop.permute.xlu0 %3017
    %3020 = vset.pattern.permute.xlu0 1
    %3021 = vperm.xlu0 %3020, %v2493
    %v3022 = vpop.permute.xlu0 %3021
    %3024 = vset.pattern.permute.xlu0 1
    %3025 = vperm.xlu0 %3024, %v2494
    %v3026 = vpop.permute.xlu0 %3025
    %3028 = vset.pattern.permute.xlu0 1
    %3029 = vperm.xlu0 %3028, %v2495
    %v3030 = vpop.permute.xlu0 %3029
    %3032 = vset.pattern.permute.xlu0 1
    %3033 = vperm.xlu0 %3032, %v2496
    %v3034 = vpop.permute.xlu0 %3033
    %3036 = vset.pattern.permute.xlu0 1
    %3037 = vperm.xlu0 %3036, %v2497
    %v3038 = vpop.permute.xlu0 %3037
    %v3040 = vmul.f32 %v2944, %v2978
    %v3041 = vmul.f32 %v2945, %v2978
    %v3042 = vmul.f32 %v2946, %v2982
    %v3043 = vmul.f32 %v2947, %v2982
    %v3044 = vmul.f32 %v2948, %v2986
    %v3045 = vmul.f32 %v2949, %v2986
    %v3046 = vmul.f32 %v2950, %v2990
    %v3047 = vmul.f32 %v2951, %v2990
    %v3048 = vmul.f32 %v2952, %v2994
    %v3049 = vmul.f32 %v2953, %v2994
    %v3050 = vmul.f32 %v2954, %v2998
    %v3051 = vmul.f32 %v2955, %v2998
    %v3052 = vmul.f32 %v2956, %v3002
    %v3053 = vmul.f32 %v2957, %v3002
    %v3054 = vmul.f32 %v2958, %v3006
    %v3055 = vmul.f32 %v2959, %v3006
    %v3056 = vmul.f32 %v2960, %v3010
    %v3057 = vmul.f32 %v2961, %v3010
    %v3058 = vmul.f32 %v2962, %v3014
    %v3059 = vmul.f32 %v2963, %v3014
    %v3060 = vmul.f32 %v2964, %v3018
    %v3061 = vmul.f32 %v2965, %v3018
    %v3062 = vmul.f32 %v2966, %v3022
    %v3063 = vmul.f32 %v2967, %v3022
    %v3064 = vmul.f32 %v2968, %v3026
    %v3065 = vmul.f32 %v2969, %v3026
    %v3066 = vmul.f32 %v2970, %v3030
    %v3067 = vmul.f32 %v2971, %v3030
    %v3068 = vmul.f32 %v2972, %v3034
    %v3069 = vmul.f32 %v2973, %v3034
    %v3070 = vmul.f32 %v2974, %v3038
    %v3071 = vmul.f32 %v2975, %v3038
    %3072 = vset.pattern.permute.xlu0 2
    %3073 = vperm.xlu0 %3072, %v2482
    %v3074 = vpop.permute.xlu0 %3073
    %3076 = vset.pattern.permute.xlu0 2
    %3077 = vperm.xlu0 %3076, %v2483
    %v3078 = vpop.permute.xlu0 %3077
    %3080 = vset.pattern.permute.xlu0 2
    %3081 = vperm.xlu0 %3080, %v2484
    %v3082 = vpop.permute.xlu0 %3081
    %3084 = vset.pattern.permute.xlu0 2
    %3085 = vperm.xlu0 %3084, %v2485
    %v3086 = vpop.permute.xlu0 %3085
    %3088 = vset.pattern.permute.xlu0 2
    %3089 = vperm.xlu0 %3088, %v2486
    %v3090 = vpop.permute.xlu0 %3089
    %3092 = vset.pattern.permute.xlu0 2
    %3093 = vperm.xlu0 %3092, %v2487
    %v3094 = vpop.permute.xlu0 %3093
    %3096 = vset.pattern.permute.xlu0 2
    %3097 = vperm.xlu0 %3096, %v2488
    %v3098 = vpop.permute.xlu0 %3097
    %3100 = vset.pattern.permute.xlu0 2
    %3101 = vperm.xlu0 %3100, %v2489
    %v3102 = vpop.permute.xlu0 %3101
    %3104 = vset.pattern.permute.xlu0 2
    %3105 = vperm.xlu0 %3104, %v2490
    %v3106 = vpop.permute.xlu0 %3105
    %3108 = vset.pattern.permute.xlu0 2
    %3109 = vperm.xlu0 %3108, %v2491
    %v3110 = vpop.permute.xlu0 %3109
    %3112 = vset.pattern.permute.xlu0 2
    %3113 = vperm.xlu0 %3112, %v2492
    %v3114 = vpop.permute.xlu0 %3113
    %3116 = vset.pattern.permute.xlu0 2
    %3117 = vperm.xlu0 %3116, %v2493
    %v3118 = vpop.permute.xlu0 %3117
    %3120 = vset.pattern.permute.xlu0 2
    %3121 = vperm.xlu0 %3120, %v2494
    %v3122 = vpop.permute.xlu0 %3121
    %3124 = vset.pattern.permute.xlu0 2
    %3125 = vperm.xlu0 %3124, %v2495
    %v3126 = vpop.permute.xlu0 %3125
    %3128 = vset.pattern.permute.xlu0 2
    %3129 = vperm.xlu0 %3128, %v2496
    %v3130 = vpop.permute.xlu0 %3129
    %3132 = vset.pattern.permute.xlu0 2
    %3133 = vperm.xlu0 %3132, %v2497
    %v3134 = vpop.permute.xlu0 %3133
    %v3136 = vadd.f32 %v3040, %v3074
    %v3137 = vadd.f32 %v3041, %v3074
    %v3138 = vadd.f32 %v3042, %v3078
    %v3139 = vadd.f32 %v3043, %v3078
    %v3140 = vadd.f32 %v3044, %v3082
    %v3141 = vadd.f32 %v3045, %v3082
    %v3142 = vadd.f32 %v3046, %v3086
    %v3143 = vadd.f32 %v3047, %v3086
    %v3144 = vadd.f32 %v3048, %v3090
    %v3145 = vadd.f32 %v3049, %v3090
    %v3146 = vadd.f32 %v3050, %v3094
    %v3147 = vadd.f32 %v3051, %v3094
    %v3148 = vadd.f32 %v3052, %v3098
    %v3149 = vadd.f32 %v3053, %v3098
    %v3150 = vadd.f32 %v3054, %v3102
    %v3151 = vadd.f32 %v3055, %v3102
    %v3152 = vadd.f32 %v3056, %v3106
    %v3153 = vadd.f32 %v3057, %v3106
    %v3154 = vadd.f32 %v3058, %v3110
    %v3155 = vadd.f32 %v3059, %v3110
    %v3156 = vadd.f32 %v3060, %v3114
    %v3157 = vadd.f32 %v3061, %v3114
    %v3158 = vadd.f32 %v3062, %v3118
    %v3159 = vadd.f32 %v3063, %v3118
    %v3160 = vadd.f32 %v3064, %v3122
    %v3161 = vadd.f32 %v3065, %v3122
    %v3162 = vadd.f32 %v3066, %v3126
    %v3163 = vadd.f32 %v3067, %v3126
    %v3164 = vadd.f32 %v3068, %v3130
    %v3165 = vadd.f32 %v3069, %v3130
    %v3166 = vadd.f32 %v3070, %v3134
    %v3167 = vadd.f32 %v3071, %v3134
    %3168 = vxpose.xlu0.b32.start [1/16] %v3136, 128
    %3169 = vxpose.xlu0.b32.cont [2/16] %v3138, 128
    %3170 = vxpose.xlu0.b32.cont [3/16] %v3140, 128
    %3171 = vxpose.xlu0.b32.cont [4/16] %v3142, 128
    %3172 = vxpose.xlu0.b32.cont [5/16] %v3144, 128
    %3173 = vxpose.xlu0.b32.cont [6/16] %v3146, 128
    %3174 = vxpose.xlu0.b32.cont [7/16] %v3148, 128
    %3175 = vxpose.xlu0.b32.cont [8/16] %v3150, 128
    %3176 = vxpose.xlu0.b32.cont [9/16] %v3152, 128
    %3177 = vxpose.xlu0.b32.cont [10/16] %v3154, 128
    %3178 = vxpose.xlu0.b32.cont [11/16] %v3156, 128
    %3179 = vxpose.xlu0.b32.cont [12/16] %v3158, 128
    %3180 = vxpose.xlu0.b32.cont [13/16] %v3160, 128
    %3181 = vxpose.xlu0.b32.cont [14/16] %v3162, 128
    %3182 = vxpose.xlu0.b32.cont [15/16] %v3164, 128
    %3183 = vxpose.xlu0.b32.end [16/16] %v3166, 128
    %v3184 = vpop.trf.xlu0
    %v3185 = vpop.trf.xlu0
    %v3186 = vpop.trf.xlu0
    %v3187 = vpop.trf.xlu0
    %v3188 = vpop.trf.xlu0
    %v3189 = vpop.trf.xlu0
    %v3190 = vpop.trf.xlu0
    %v3191 = vpop.trf.xlu0
    %v3192 = vpop.trf.xlu0
    %v3193 = vpop.trf.xlu0
    %v3194 = vpop.trf.xlu0
    %v3195 = vpop.trf.xlu0
    %v3196 = vpop.trf.xlu0
    %v3197 = vpop.trf.xlu0
    %v3198 = vpop.trf.xlu0
    %v3199 = vpop.trf.xlu0
    %3200 = vst [vmem:[#allocation2] sm:$0xff] %v3184
    %3201 = vst [vmem:[#allocation2 + $0x8] sm:$0xff] %v3185
    %3202 = vst [vmem:[#allocation2 + $0x10] sm:$0xff] %v3186
    %3203 = vst [vmem:[#allocation2 + $0x18] sm:$0xff] %v3187
    %3204 = vst [vmem:[#allocation2 + $0x20] sm:$0xff] %v3188
    %3205 = vst [vmem:[#allocation2 + $0x28] sm:$0xff] %v3189
    %3206 = vst [vmem:[#allocation2 + $0x30] sm:$0xff] %v3190
    %3207 = vst [vmem:[#allocation2 + $0x38] sm:$0xff] %v3191
    %3208 = vst [vmem:[#allocation2 + $0x40] sm:$0xff] %v3192
    %3209 = vst [vmem:[#allocation2 + $0x48] sm:$0xff] %v3193
    %3210 = vst [vmem:[#allocation2 + $0x50] sm:$0xff] %v3194
    %3211 = vst [vmem:[#allocation2 + $0x58] sm:$0xff] %v3195
    %3212 = vst [vmem:[#allocation2 + $0x60] sm:$0xff] %v3196
    %3213 = vst [vmem:[#allocation2 + $0x68] sm:$0xff] %v3197
    %3214 = vst [vmem:[#allocation2 + $0x70] sm:$0xff] %v3198
    %3215 = vst [vmem:[#allocation2 + $0x78] sm:$0xff] %v3199
    %3216 = vxpose.xlu0.b32.start [1/16] %v3137, 128
    %3217 = vxpose.xlu0.b32.cont [2/16] %v3139, 128
    %3218 = vxpose.xlu0.b32.cont [3/16] %v3141, 128
    %3219 = vxpose.xlu0.b32.cont [4/16] %v3143, 128
    %3220 = vxpose.xlu0.b32.cont [5/16] %v3145, 128
    %3221 = vxpose.xlu0.b32.cont [6/16] %v3147, 128
    %3222 = vxpose.xlu0.b32.cont [7/16] %v3149, 128
    %3223 = vxpose.xlu0.b32.cont [8/16] %v3151, 128
    %3224 = vxpose.xlu0.b32.cont [9/16] %v3153, 128
    %3225 = vxpose.xlu0.b32.cont [10/16] %v3155, 128
    %3226 = vxpose.xlu0.b32.cont [11/16] %v3157, 128
    %3227 = vxpose.xlu0.b32.cont [12/16] %v3159, 128
    %3228 = vxpose.xlu0.b32.cont [13/16] %v3161, 128
    %3229 = vxpose.xlu0.b32.cont [14/16] %v3163, 128
    %3230 = vxpose.xlu0.b32.cont [15/16] %v3165, 128
    %3231 = vxpose.xlu0.b32.end [16/16] %v3167, 128
    %v3232 = vpop.trf.xlu0
    %v3233 = vpop.trf.xlu0
    %v3234 = vpop.trf.xlu0
    %v3235 = vpop.trf.xlu0
    %v3236 = vpop.trf.xlu0
    %v3237 = vpop.trf.xlu0
    %v3238 = vpop.trf.xlu0
    %v3239 = vpop.trf.xlu0
    %v3240 = vpop.trf.xlu0
    %v3241 = vpop.trf.xlu0
    %v3242 = vpop.trf.xlu0
    %v3243 = vpop.trf.xlu0
    %v3244 = vpop.trf.xlu0
    %v3245 = vpop.trf.xlu0
    %v3246 = vpop.trf.xlu0
    %v3247 = vpop.trf.xlu0
    %s3248 = scalar_lea.vmem [#allocation2], 128
    %3249 = vst [vmem:[%s3248] sm:$0xff] %v3232
    %3250 = vst [vmem:[%s3248 + $0x8] sm:$0xff] %v3233
    %3251 = vst [vmem:[%s3248 + $0x10] sm:$0xff] %v3234
    %3252 = vst [vmem:[%s3248 + $0x18] sm:$0xff] %v3235
    %3253 = vst [vmem:[%s3248 + $0x20] sm:$0xff] %v3236
    %3254 = vst [vmem:[%s3248 + $0x28] sm:$0xff] %v3237
    %3255 = vst [vmem:[%s3248 + $0x30] sm:$0xff] %v3238
    %3256 = vst [vmem:[%s3248 + $0x38] sm:$0xff] %v3239
    %3257 = vst [vmem:[%s3248 + $0x40] sm:$0xff] %v3240
    %3258 = vst [vmem:[%s3248 + $0x48] sm:$0xff] %v3241
    %3259 = vst [vmem:[%s3248 + $0x50] sm:$0xff] %v3242
    %3260 = vst [vmem:[%s3248 + $0x58] sm:$0xff] %v3243
    %3261 = vst [vmem:[%s3248 + $0x60] sm:$0xff] %v3244
    %3262 = vst [vmem:[%s3248 + $0x68] sm:$0xff] %v3245
    %3263 = vst [vmem:[%s3248 + $0x70] sm:$0xff] %v3246
    %3264 = vst [vmem:[%s3248 + $0x78] sm:$0xff] %v3247
    // Predicated region
    $region14: #{tpu_custom_call.1} parent=1 // pred_check
      _
    $region15: #{tpu_custom_call.1} parent=1 // pred_check_branch
      %3266 = sbr.rel (0) target = $region17
    $region16: #{tpu_custom_call.1} parent=1 // pred_region
      %s3268 = ssub.s32 4096, 4096
      %3269 = vsyncadd [#allocation3], %s3268
      %s3270 = sshll.u32 [#allocation2], 4
      %s3271 = int_to_ptr.vmem [resolvable:$true] %s3270
      %3276 = dma.vmem_to_hbm [thread:$0]  %s3271, 4096, %s3, [#allocation3], 128, 128, 8
    $region17: #{tpu_custom_call.1} parent=1 // pred_fallthru
      _
    // Predicated region
    $region18: #{tpu_custom_call.1} parent=1 // pred_check
      _
    $region19: #{tpu_custom_call.1} parent=1 // pred_check_branch
      %3278 = sbr.rel (0) target = $region21
    $region20: #{tpu_custom_call.1} parent=1 // pred_region
      %3279 = dma.done [#allocation3], 4096
    $region21: #{tpu_custom_call.1} parent=1 // pred_fallthru
      _
    %3280 = vsyncpa [#allocation3], 1

</llo_original>
